<compile_context>
chip_gen: v6e
topology: v6e:2x2x1
jax: 0.10.0
libtpu: 0.0.40
codegen_flags: <defaults>
</compile_context>

<pallas_src>
import functools

import jax
import jax.numpy as jnp
from jax.experimental import pallas as pl
from jax.experimental.pallas import tpu as pltpu


# ---------------------------------------------------------------------------
# small helpers: padding / tile selection
# ---------------------------------------------------------------------------
def _round_up(x, m):
    return (x + m - 1) // m * m


def _pick_tile(dim, target, align):
    """Pad `dim` to a multiple of `align`; pick the largest tile <= target that
    is a multiple of `align` and divides the padded dim."""
    dp = _round_up(dim, align)
    best = align
    t = align
    while t <= min(target, dp):
        if dp % t == 0:
            best = t
        t += align
    return dp, best


def _pad2(a, rows, cols):
    r, c = a.shape
    if r == rows and c == cols:
        return a
    return jnp.pad(a, ((0, rows - r), (0, cols - c)))


# ---------------------------------------------------------------------------
# Pallas kernel 1: tiled  y = (optional ReLU)(x @ w + b)
#   grid = (M/TM, N/TN, K/TK); fp32 accumulator in VMEM, bf16 MXU inputs.
# ---------------------------------------------------------------------------
def _gemm_bias_act_kernel(x_ref, w_ref, b_ref, o_ref, acc_ref, *, apply_relu):
    k = pl.program_id(2)

    @pl.when(k == 0)
    def _():
        acc_ref[...] = jnp.zeros_like(acc_ref)

    acc_ref[...] += jnp.dot(x_ref[...], w_ref[...],
                            preferred_element_type=jnp.float32)

    @pl.when(k == pl.num_programs(2) - 1)
    def _():
        out = acc_ref[...] + b_ref[...]          # (1, TN) bias broadcasts
        if apply_relu:
            out = jnp.maximum(out, 0.0)
        o_ref[...] = out.astype(o_ref.dtype)


def gemm_bias_act(x, w, b, apply_relu):
    """x: [M, K] f32, w: [K, N] f32, b: [N] f32 -> [M, N] f32."""
    M, K = x.shape
    K2, N = w.shape
    assert K == K2, (K, K2)

    Mp, TM = _pick_tile(M, 256, 16)    # sublane align (16 for bf16 packing)
    Np, TN = _pick_tile(N, 256, 128)   # lane-dense output
    Kp, TK = _pick_tile(K, 512, 128)

    xp = _pad2(x, Mp, Kp).astype(jnp.bfloat16)
    wp = _pad2(w, Kp, Np).astype(jnp.bfloat16)
    bp = _pad2(b.reshape(1, N).astype(jnp.float32), 1, Np)

    kernel = functools.partial(_gemm_bias_act_kernel, apply_relu=apply_relu)
    out = pl.pallas_call(
        kernel,
        out_shape=jax.ShapeDtypeStruct((Mp, Np), jnp.float32),
        grid_spec=pltpu.PrefetchScalarGridSpec(
            num_scalar_prefetch=0,
            grid=(Mp // TM, Np // TN, Kp // TK),
            in_specs=[
                pl.BlockSpec((TM, TK), lambda i, j, k: (i, k)),
                pl.BlockSpec((TK, TN), lambda i, j, k: (k, j)),
                pl.BlockSpec((1, TN), lambda i, j, k: (0, j)),
            ],
            out_specs=pl.BlockSpec((TM, TN), lambda i, j, k: (i, j)),
            scratch_shapes=[pltpu.VMEM((TM, TN), jnp.float32)],
        ),
        compiler_params=pltpu.CompilerParams(
            dimension_semantics=("parallel", "parallel", "arbitrary")),
    )(xp, wp, bp)
    return out[:M, :N]


# ---------------------------------------------------------------------------
# Pallas kernel 2: fused fc1+fc2
#   actions = relu(x @ w1 + b1) @ w2 + b2, hidden kept in VMEM scratch.
#   grid = (M/TM, K1/TK); K1 streamed, hidden (512) and padded A held resident.
# ---------------------------------------------------------------------------
def _fused_fc_kernel(x_ref, w1_ref, b1_ref, w2_ref, b2_ref, o_ref, h_acc):
    k = pl.program_id(1)

    @pl.when(k == 0)
    def _():
        h_acc[...] = jnp.zeros_like(h_acc)

    h_acc[...] += jnp.dot(x_ref[...], w1_ref[...],
                          preferred_element_type=jnp.float32)

    @pl.when(k == pl.num_programs(1) - 1)
    def _():
        h = jnp.maximum(h_acc[...] + b1_ref[...], 0.0).astype(w2_ref.dtype)
        out = jnp.dot(h, w2_ref[...], preferred_element_type=jnp.float32)
        o_ref[...] = (out + b2_ref[...]).astype(o_ref.dtype)


def fused_fc(x, w1, b1, w2, b2):
    """x: [M, F], w1: [F, H], b1: [H], w2: [H, A], b2: [A] -> [M, A]."""
    M, F = x.shape
    F2, H = w1.shape
    H2, A = w2.shape
    assert F == F2 and H == H2

    Mp, TM = _pick_tile(M, 256, 16)
    Fp, TF = _pick_tile(F, 512, 128)
    Hp = _round_up(H, 128)              # 512 already lane-aligned
    Ap = _round_up(A, 128)              # pad tiny n_actions to one lane tile

    xp = _pad2(x, Mp, Fp).astype(jnp.bfloat16)
    w1p = _pad2(w1, Fp, Hp).astype(jnp.bfloat16)
    b1p = _pad2(b1.reshape(1, H).astype(jnp.float32), 1, Hp)
    w2p = _pad2(w2, Hp, Ap).astype(jnp.bfloat16)
    b2p = _pad2(b2.reshape(1, A).astype(jnp.float32), 1, Ap)

    out = pl.pallas_call(
        _fused_fc_kernel,
        out_shape=jax.ShapeDtypeStruct((Mp, Ap), jnp.float32),
        grid_spec=pltpu.PrefetchScalarGridSpec(
            num_scalar_prefetch=0,
            grid=(Mp // TM, Fp // TF),
            in_specs=[
                pl.BlockSpec((TM, TF), lambda i, k: (i, k)),
                pl.BlockSpec((TF, Hp), lambda i, k: (k, 0)),
                pl.BlockSpec((1, Hp), lambda i, k: (0, 0)),
                pl.BlockSpec((Hp, Ap), lambda i, k: (0, 0)),
                pl.BlockSpec((1, Ap), lambda i, k: (0, 0)),
            ],
            out_specs=pl.BlockSpec((TM, Ap), lambda i, k: (i, 0)),
            scratch_shapes=[pltpu.VMEM((TM, Hp), jnp.float32)],
        ),
        compiler_params=pltpu.CompilerParams(
            dimension_semantics=("parallel", "arbitrary")),
    )(xp, w1p, b1p, w2p, b2p)
    return out[:M, :A]


# ---------------------------------------------------------------------------
# im2col glue (layout only; GEMM happens in the Pallas kernels above).
# No patch transpose: the weight matrix is pre-permuted to the natural
# [kH, kW, C] patch order instead.
# ---------------------------------------------------------------------------
# TODO(synk): move conv1's im2col inside the kernel (strided VMEM reads / manual
# DMA gather) so the k^2/s^2-inflated patch matrix never round-trips HBM.
def im2col(x_nhwc, k, s):
    B, H, W, C = x_nhwc.shape
    Ho = (H - k) // s + 1
    Wo = (W - k) // s + 1
    cols = []
    for i in range(k):
        for j in range(k):
            sl = x_nhwc[:, i:i + (Ho - 1) * s + 1:s, j:j + (Wo - 1) * s + 1:s, :]
            cols.append(sl)                              # [B, Ho, Wo, C]
    p = jnp.stack(cols, axis=3)                          # [B, Ho, Wo, k*k, C]
    return p.reshape(B * Ho * Wo, k * k * C), Ho, Wo


def conv2d_relu(x_nhwc, w_mat, b, k, s):
    B = x_nhwc.shape[0]
    O = w_mat.shape[1]
    patches, Ho, Wo = im2col(x_nhwc, k, s)               # [B*Ho*Wo, k*k*C]
    y = gemm_bias_act(patches, w_mat, b, apply_relu=True)
    return y.reshape(B, Ho, Wo, O)


# ---------------------------------------------------------------------------
# Parameters (PyTorch layout) + one-time conversion to GEMM layout
# ---------------------------------------------------------------------------
def conv_spatial_dims(input_dims):
    _, h, w = input_dims
    h, w = (h - 8) // 4 + 1, (w - 8) // 4 + 1
    h, w = (h - 4) // 2 + 1, (w - 4) // 2 + 1
    h, w = (h - 3) // 1 + 1, (w - 3) // 1 + 1
    return h, w


def init_params(key, in_ch, n_actions, flat_dims):
    ks = jax.random.split(key, 10)

    def u(k, shape, fan_in):
        bound = 1.0 / jnp.sqrt(jnp.float32(fan_in))
        return jax.random.uniform(k, shape, jnp.float32, -bound, bound)

    return {
        "conv1_w": u(ks[0], (32, in_ch, 8, 8), in_ch * 8 * 8),
        "conv1_b": u(ks[1], (32,), in_ch * 8 * 8),
        "conv2_w": u(ks[2], (64, 32, 4, 4), 32 * 4 * 4),
        "conv2_b": u(ks[3], (64,), 32 * 4 * 4),
        "conv3_w": u(ks[4], (64, 64, 3, 3), 64 * 3 * 3),
        "conv3_b": u(ks[5], (64,), 64 * 3 * 3),
        "fc1_w":   u(ks[6], (512, flat_dims), flat_dims),
        "fc1_b":   u(ks[7], (512,), flat_dims),
        "fc2_w":   u(ks[8], (n_actions, 512), 512),
        "fc2_b":   u(ks[9], (n_actions,), 512),
    }


def prepare_gemm_params(params, conv3_hw):
    """One-time conversion of PyTorch-layout weights into GEMM-ready matrices.

    Conv weights (O, C, kH, kW) -> (kH*kW*C, O): matches the natural im2col
    patch order, so no per-forward patch transpose.  fc1's columns are permuted
    from torch's (C, H, W) flatten order to NHWC (H, W, C) order so conv3's
    output flattens directly.
    """
    def conv_w(w):
        o, c, kh, kw = w.shape
        return jnp.transpose(w, (2, 3, 1, 0)).reshape(kh * kw * c, o)

    h3, w3 = conv3_hw
    fc1_w = params["fc1_w"].reshape(512, 64, h3, w3)
    fc1_w = jnp.transpose(fc1_w, (0, 2, 3, 1)).reshape(512, -1).T   # [H*W*C, 512]
    return {
        "c1_w": conv_w(params["conv1_w"]), "c1_b": params["conv1_b"],
        "c2_w": conv_w(params["conv2_w"]), "c2_b": params["conv2_b"],
        "c3_w": conv_w(params["conv3_w"]), "c3_b": params["conv3_b"],
        "fc1_w": fc1_w,                    "fc1_b": params["fc1_b"],
        "fc2_w": params["fc2_w"].T,        "fc2_b": params["fc2_b"],
    }


# ---------------------------------------------------------------------------
# Forward pass (== DeepQNetwork.forward)
# ---------------------------------------------------------------------------
def dqn_forward(gp, state_nchw):
    B = state_nchw.shape[0]
    x = jnp.transpose(state_nchw, (0, 2, 3, 1)).astype(jnp.float32)   # NCHW->NHWC
    x = conv2d_relu(x, gp["c1_w"], gp["c1_b"], 8, 4)
    x = conv2d_relu(x, gp["c2_w"], gp["c2_b"], 4, 2)
    x = conv2d_relu(x, gp["c3_w"], gp["c3_b"], 3, 1)
    x = x.reshape(B, -1)                 # NHWC flatten; fc1_w already permuted
    return fused_fc(x, gp["fc1_w"], gp["fc1_b"], gp["fc2_w"], gp["fc2_b"])
    # TODO(synk): Adam optimizer, MSELoss, save/load — training/IO machinery,
    # not part of forward.


# ---------------------------------------------------------------------------
# Pure-JAX reference (PyTorch semantics) for correctness check
# ---------------------------------------------------------------------------
def _ref_forward(params, x_nchw):
    def conv(x, w, b, s):
        y = jax.lax.conv_general_dilated(
            x, w, (s, s), "VALID",
            dimension_numbers=("NCHW", "OIHW", "NCHW"))
        return jax.nn.relu(y + b[None, :, None, None])

    x = conv(x_nchw, params["conv1_w"], params["conv1_b"], 4)
    x = conv(x, params["conv2_w"], params["conv2_b"], 2)
    x = conv(x, params["conv3_w"], params["conv3_b"], 1)
    x = x.reshape(x.shape[0], -1)                       # torch view(B, -1) order
    x = jax.nn.relu(x @ params["fc1_w"].T + params["fc1_b"])
    return x @ params["fc2_w"].T + params["fc2_b"]


if __name__ == "__main__":
    # Smallest spatial size that survives k=8/s=4, k=4/s=2, k=3/s=1: 36 -> 8 -> 3 -> 1
    input_dims = (4, 36, 36)
    batch = 2
    n_actions = 6

    key = jax.random.PRNGKey(0)
    pkey, xkey = jax.random.split(key)
    h3, w3 = conv_spatial_dims(input_dims)
    flat = 64 * h3 * w3
    params = init_params(pkey, input_dims[0], n_actions, flat)
    gemm_params = prepare_gemm_params(params, (h3, w3))

    x = jax.random.normal(xkey, (batch, *input_dims), dtype=jnp.float32)

    fwd = jax.jit(dqn_forward)
    actions = jax.block_until_ready(fwd(gemm_params, x))
    assert actions.shape == (batch, n_actions), actions.shape
    assert bool(jnp.all(jnp.isfinite(actions)))

    # Loose tolerance: kernel uses bf16 MXU inputs with fp32 accumulation.
    ref = jax.block_until_ready(_ref_forward(params, x))
    assert jnp.allclose(actions, ref, rtol=5e-2, atol=5e-2), \
        float(jnp.max(jnp.abs(actions - ref)))
    print("KERNEL_OK")
</pallas_src>

<mosaic_0001>
module attributes {stable_mosaic.version = 11 : i64} {
  func.func @_gemm_bias_act_kernel(%arg0: i32, %arg1: i32, %arg2: i32, %arg3: memref<128x256xbf16, #tpu.memory_space<vmem>>, %arg4: memref<256x128xbf16, #tpu.memory_space<vmem>>, %arg5: memref<1x128xf32, #tpu.memory_space<vmem>>, %arg6: memref<128x128xf32, #tpu.memory_space<vmem>>, %arg7: memref<128x128xf32, #tpu.memory_space<vmem>>) attributes {dimension_semantics = [#tpu.dimension_semantics<parallel>, #tpu.dimension_semantics<parallel>, #tpu.dimension_semantics<arbitrary>], iteration_bounds = array<i64: 1, 1, 1>, scalar_prefetch = 0 : i64, scratch_operands = 1 : i64, tpu.core_type = #tpu.core_type<tc>, window_params = [{transform_indices = @transform_0, window_bounds = array<i64: 128, 256>}, {transform_indices = @transform_1, window_bounds = array<i64: 256, 128>}, {transform_indices = @transform_2, window_bounds = array<i64: 1, 128>}, {transform_indices = @transform_3, window_bounds = array<i64: 128, 128>}]} {
    %c0_i32 = arith.constant 0 : i32
    %0 = arith.cmpi eq, %arg2, %c0_i32 : i32
    %1 = arith.extui %0 : i1 to i32
    %c0_i32_0 = arith.constant 0 : i32
    %2 = arith.cmpi ne, %1, %c0_i32_0 : i32
    scf.if %2 {
      %cst_10 = arith.constant 0.000000e+00 : f32
      %12 = vector.broadcast %cst_10 : f32 to vector<128x128xf32>
      %c0_11 = arith.constant 0 : index
      %c0_12 = arith.constant 0 : index
      %13 = vector.load %arg7[%c0_11, %c0_12] : memref<128x128xf32, #tpu.memory_space<vmem>>, vector<128x128xf32>
      tpu.vector_store %arg7[%c0_11, %c0_12], %12 {strides = array<i32>} : memref<128x128xf32, #tpu.memory_space<vmem>>, vector<128x128xf32>,
    } else {
    }
    %c0 = arith.constant 0 : index
    %c0_1 = arith.constant 0 : index
    %3 = vector.load %arg7[%c0, %c0_1] : memref<128x128xf32, #tpu.memory_space<vmem>>, vector<128x128xf32>
    %c0_2 = arith.constant 0 : index
    %c0_3 = arith.constant 0 : index
    %4 = vector.load %arg3[%c0_2, %c0_3] : memref<128x256xbf16, #tpu.memory_space<vmem>>, vector<128x256xbf16>
    %c0_4 = arith.constant 0 : index
    %c0_5 = arith.constant 0 : index
    %5 = vector.load %arg4[%c0_4, %c0_5] : memref<256x128xbf16, #tpu.memory_space<vmem>>, vector<256x128xbf16>
    %cst = arith.constant dense<0.000000e+00> : vector<128x128xf32>
    %6 = tpu.matmul %4, %5, %cst {dimension_numbers = #tpu.dot_dimension_numbers<[1], [0], [0], [1], [0, 0, 1, 1], [], []>} : vector<128x256xbf16>, vector<256x128xbf16>, vector<128x128xf32> -> vector<128x128xf32>
    %7 = arith.addf %3, %6 : vector<128x128xf32>
    %c0_6 = arith.constant 0 : index
    %c0_7 = arith.constant 0 : index
    %8 = vector.load %arg7[%c0_6, %c0_7] : memref<128x128xf32, #tpu.memory_space<vmem>>, vector<128x128xf32>
    tpu.vector_store %arg7[%c0_6, %c0_7], %7 {strides = array<i32>} : memref<128x128xf32, #tpu.memory_space<vmem>>, vector<128x128xf32>,
    %c0_i32_8 = arith.constant 0 : i32
    %9 = arith.cmpi eq, %arg2, %c0_i32_8 : i32
    %10 = arith.extui %9 : i1 to i32
    %c0_i32_9 = arith.constant 0 : i32
    %11 = arith.cmpi ne, %10, %c0_i32_9 : i32
    scf.if %11 {
      %c0_10 = arith.constant 0 : index
      %c0_11 = arith.constant 0 : index
      %12 = vector.load %arg7[%c0_10, %c0_11] : memref<128x128xf32, #tpu.memory_space<vmem>>, vector<128x128xf32>
      %c0_12 = arith.constant 0 : index
      %c0_13 = arith.constant 0 : index
      %13 = vector.load %arg5[%c0_12, %c0_13] : memref<1x128xf32, #tpu.memory_space<vmem>>, vector<1x128xf32>
      %14 = vector.broadcast %13 : vector<1x128xf32> to vector<128x128xf32>
      %15 = arith.addf %12, %14 : vector<128x128xf32>
      %cst_14 = arith.constant 0.000000e+00 : f32
      %16 = vector.broadcast %cst_14 : f32 to vector<128x128xf32>
      %17 = arith.maximumf %15, %16 : vector<128x128xf32>
      %c0_15 = arith.constant 0 : index
      %c0_16 = arith.constant 0 : index
      %18 = vector.load %arg6[%c0_15, %c0_16] : memref<128x128xf32, #tpu.memory_space<vmem>>, vector<128x128xf32>
      tpu.vector_store %arg6[%c0_15, %c0_16], %17 {strides = array<i32>} : memref<128x128xf32, #tpu.memory_space<vmem>>, vector<128x128xf32>,
    } else {
    }
    return
  }
  func.func @transform_0(%arg0: i32, %arg1: i32, %arg2: i32) -> (i32, i32) {
    %c0_i32 = arith.constant 0 : i32
    return %arg0, %arg2 : i32, i32
  }
  func.func @transform_1(%arg0: i32, %arg1: i32, %arg2: i32) -> (i32, i32) {
    %c0_i32 = arith.constant 0 : i32
    return %arg2, %arg1 : i32, i32
  }
  func.func @transform_2(%arg0: i32, %arg1: i32, %arg2: i32) -> (i32, i32) {
    %c0_i32 = arith.constant 0 : i32
    %c0_i32_0 = arith.constant 0 : i32
    return %c0_i32, %arg1 : i32, i32
  }
  func.func @transform_3(%arg0: i32, %arg1: i32, %arg2: i32) -> (i32, i32) {
    %c0_i32 = arith.constant 0 : i32
    return %arg0, %arg1 : i32, i32
  }
}

module attributes {stable_mosaic.version = 11 : i64} {
  func.func @_gemm_bias_act_kernel(%arg0: i32, %arg1: i32, %arg2: i32, %arg3: memref<32x512xbf16, #tpu.memory_space<vmem>>, %arg4: memref<512x128xbf16, #tpu.memory_space<vmem>>, %arg5: memref<1x128xf32, #tpu.memory_space<vmem>>, %arg6: memref<32x128xf32, #tpu.memory_space<vmem>>, %arg7: memref<32x128xf32, #tpu.memory_space<vmem>>) attributes {dimension_semantics = [#tpu.dimension_semantics<parallel>, #tpu.dimension_semantics<parallel>, #tpu.dimension_semantics<arbitrary>], iteration_bounds = array<i64: 1, 1, 1>, scalar_prefetch = 0 : i64, scratch_operands = 1 : i64, tpu.core_type = #tpu.core_type<tc>, window_params = [{transform_indices = @transform_0, window_bounds = array<i64: 32, 512>}, {transform_indices = @transform_1, window_bounds = array<i64: 512, 128>}, {transform_indices = @transform_2, window_bounds = array<i64: 1, 128>}, {transform_indices = @transform_3, window_bounds = array<i64: 32, 128>}]} {
    %c0_i32 = arith.constant 0 : i32
    %0 = arith.cmpi eq, %arg2, %c0_i32 : i32
    %1 = arith.extui %0 : i1 to i32
    %c0_i32_0 = arith.constant 0 : i32
    %2 = arith.cmpi ne, %1, %c0_i32_0 : i32
    scf.if %2 {
      %cst_10 = arith.constant 0.000000e+00 : f32
      %12 = vector.broadcast %cst_10 : f32 to vector<32x128xf32>
      %c0_11 = arith.constant 0 : index
      %c0_12 = arith.constant 0 : index
      %13 = vector.load %arg7[%c0_11, %c0_12] : memref<32x128xf32, #tpu.memory_space<vmem>>, vector<32x128xf32>
      tpu.vector_store %arg7[%c0_11, %c0_12], %12 {strides = array<i32>} : memref<32x128xf32, #tpu.memory_space<vmem>>, vector<32x128xf32>,
    } else {
    }
    %c0 = arith.constant 0 : index
    %c0_1 = arith.constant 0 : index
    %3 = vector.load %arg7[%c0, %c0_1] : memref<32x128xf32, #tpu.memory_space<vmem>>, vector<32x128xf32>
    %c0_2 = arith.constant 0 : index
    %c0_3 = arith.constant 0 : index
    %4 = vector.load %arg3[%c0_2, %c0_3] : memref<32x512xbf16, #tpu.memory_space<vmem>>, vector<32x512xbf16>
    %c0_4 = arith.constant 0 : index
    %c0_5 = arith.constant 0 : index
    %5 = vector.load %arg4[%c0_4, %c0_5] : memref<512x128xbf16, #tpu.memory_space<vmem>>, vector<512x128xbf16>
    %cst = arith.constant dense<0.000000e+00> : vector<32x128xf32>
    %6 = tpu.matmul %4, %5, %cst {dimension_numbers = #tpu.dot_dimension_numbers<[1], [0], [0], [1], [0, 0, 1, 1], [], []>} : vector<32x512xbf16>, vector<512x128xbf16>, vector<32x128xf32> -> vector<32x128xf32>
    %7 = arith.addf %3, %6 : vector<32x128xf32>
    %c0_6 = arith.constant 0 : index
    %c0_7 = arith.constant 0 : index
    %8 = vector.load %arg7[%c0_6, %c0_7] : memref<32x128xf32, #tpu.memory_space<vmem>>, vector<32x128xf32>
    tpu.vector_store %arg7[%c0_6, %c0_7], %7 {strides = array<i32>} : memref<32x128xf32, #tpu.memory_space<vmem>>, vector<32x128xf32>,
    %c0_i32_8 = arith.constant 0 : i32
    %9 = arith.cmpi eq, %arg2, %c0_i32_8 : i32
    %10 = arith.extui %9 : i1 to i32
    %c0_i32_9 = arith.constant 0 : i32
    %11 = arith.cmpi ne, %10, %c0_i32_9 : i32
    scf.if %11 {
      %c0_10 = arith.constant 0 : index
      %c0_11 = arith.constant 0 : index
      %12 = vector.load %arg7[%c0_10, %c0_11] : memref<32x128xf32, #tpu.memory_space<vmem>>, vector<32x128xf32>
      %c0_12 = arith.constant 0 : index
      %c0_13 = arith.constant 0 : index
      %13 = vector.load %arg5[%c0_12, %c0_13] : memref<1x128xf32, #tpu.memory_space<vmem>>, vector<1x128xf32>
      %14 = vector.broadcast %13 : vector<1x128xf32> to vector<32x128xf32>
      %15 = arith.addf %12, %14 : vector<32x128xf32>
      %cst_14 = arith.constant 0.000000e+00 : f32
      %16 = vector.broadcast %cst_14 : f32 to vector<32x128xf32>
      %17 = arith.maximumf %15, %16 : vector<32x128xf32>
      %c0_15 = arith.constant 0 : index
      %c0_16 = arith.constant 0 : index
      %18 = vector.load %arg6[%c0_15, %c0_16] : memref<32x128xf32, #tpu.memory_space<vmem>>, vector<32x128xf32>
      tpu.vector_store %arg6[%c0_15, %c0_16], %17 {strides = array<i32>} : memref<32x128xf32, #tpu.memory_space<vmem>>, vector<32x128xf32>,
    } else {
    }
    return
  }
  func.func @transform_0(%arg0: i32, %arg1: i32, %arg2: i32) -> (i32, i32) {
    %c0_i32 = arith.constant 0 : i32
    return %arg0, %arg2 : i32, i32
  }
  func.func @transform_1(%arg0: i32, %arg1: i32, %arg2: i32) -> (i32, i32) {
    %c0_i32 = arith.constant 0 : i32
    return %arg2, %arg1 : i32, i32
  }
  func.func @transform_2(%arg0: i32, %arg1: i32, %arg2: i32) -> (i32, i32) {
    %c0_i32 = arith.constant 0 : i32
    %c0_i32_0 = arith.constant 0 : i32
    return %c0_i32, %arg1 : i32, i32
  }
  func.func @transform_3(%arg0: i32, %arg1: i32, %arg2: i32) -> (i32, i32) {
    %c0_i32 = arith.constant 0 : i32
    return %arg0, %arg1 : i32, i32
  }
}

module attributes {stable_mosaic.version = 11 : i64} {
  func.func @_gemm_bias_act_kernel(%arg0: i32, %arg1: i32, %arg2: i32, %arg3: memref<16x128xbf16, #tpu.memory_space<vmem>>, %arg4: memref<128x128xbf16, #tpu.memory_space<vmem>>, %arg5: memref<1x128xf32, #tpu.memory_space<vmem>>, %arg6: memref<16x128xf32, #tpu.memory_space<vmem>>, %arg7: memref<16x128xf32, #tpu.memory_space<vmem>>) attributes {dimension_semantics = [#tpu.dimension_semantics<parallel>, #tpu.dimension_semantics<parallel>, #tpu.dimension_semantics<arbitrary>], iteration_bounds = array<i64: 1, 1, 5>, scalar_prefetch = 0 : i64, scratch_operands = 1 : i64, tpu.core_type = #tpu.core_type<tc>, window_params = [{transform_indices = @transform_0, window_bounds = array<i64: 16, 128>}, {transform_indices = @transform_1, window_bounds = array<i64: 128, 128>}, {transform_indices = @transform_2, window_bounds = array<i64: 1, 128>}, {transform_indices = @transform_3, window_bounds = array<i64: 16, 128>}]} {
    %c0_i32 = arith.constant 0 : i32
    %0 = arith.cmpi eq, %arg2, %c0_i32 : i32
    %1 = arith.extui %0 : i1 to i32
    %c0_i32_0 = arith.constant 0 : i32
    %2 = arith.cmpi ne, %1, %c0_i32_0 : i32
    scf.if %2 {
      %cst_9 = arith.constant 0.000000e+00 : f32
      %12 = vector.broadcast %cst_9 : f32 to vector<16x128xf32>
      %c0_10 = arith.constant 0 : index
      %c0_11 = arith.constant 0 : index
      %13 = vector.load %arg7[%c0_10, %c0_11] : memref<16x128xf32, #tpu.memory_space<vmem>>, vector<16x128xf32>
      tpu.vector_store %arg7[%c0_10, %c0_11], %12 {strides = array<i32>} : memref<16x128xf32, #tpu.memory_space<vmem>>, vector<16x128xf32>,
    } else {
    }
    %c0 = arith.constant 0 : index
    %c0_1 = arith.constant 0 : index
    %3 = vector.load %arg7[%c0, %c0_1] : memref<16x128xf32, #tpu.memory_space<vmem>>, vector<16x128xf32>
    %c0_2 = arith.constant 0 : index
    %c0_3 = arith.constant 0 : index
    %4 = vector.load %arg3[%c0_2, %c0_3] : memref<16x128xbf16, #tpu.memory_space<vmem>>, vector<16x128xbf16>
    %c0_4 = arith.constant 0 : index
    %c0_5 = arith.constant 0 : index
    %5 = vector.load %arg4[%c0_4, %c0_5] : memref<128x128xbf16, #tpu.memory_space<vmem>>, vector<128x128xbf16>
    %cst = arith.constant dense<0.000000e+00> : vector<16x128xf32>
    %6 = tpu.matmul %4, %5, %cst {dimension_numbers = #tpu.dot_dimension_numbers<[1], [0], [0], [1], [0, 0, 1, 1], [], []>} : vector<16x128xbf16>, vector<128x128xbf16>, vector<16x128xf32> -> vector<16x128xf32>
    %7 = arith.addf %3, %6 : vector<16x128xf32>
    %c0_6 = arith.constant 0 : index
    %c0_7 = arith.constant 0 : index
    %8 = vector.load %arg7[%c0_6, %c0_7] : memref<16x128xf32, #tpu.memory_space<vmem>>, vector<16x128xf32>
    tpu.vector_store %arg7[%c0_6, %c0_7], %7 {strides = array<i32>} : memref<16x128xf32, #tpu.memory_space<vmem>>, vector<16x128xf32>,
    %c4_i32 = arith.constant 4 : i32
    %9 = arith.cmpi eq, %arg2, %c4_i32 : i32
    %10 = arith.extui %9 : i1 to i32
    %c0_i32_8 = arith.constant 0 : i32
    %11 = arith.cmpi ne, %10, %c0_i32_8 : i32
    scf.if %11 {
      %c0_9 = arith.constant 0 : index
      %c0_10 = arith.constant 0 : index
      %12 = vector.load %arg7[%c0_9, %c0_10] : memref<16x128xf32, #tpu.memory_space<vmem>>, vector<16x128xf32>
      %c0_11 = arith.constant 0 : index
      %c0_12 = arith.constant 0 : index
      %13 = vector.load %arg5[%c0_11, %c0_12] : memref<1x128xf32, #tpu.memory_space<vmem>>, vector<1x128xf32>
      %14 = vector.broadcast %13 : vector<1x128xf32> to vector<16x128xf32>
      %15 = arith.addf %12, %14 : vector<16x128xf32>
      %cst_13 = arith.constant 0.000000e+00 : f32
      %16 = vector.broadcast %cst_13 : f32 to vector<16x128xf32>
      %17 = arith.maximumf %15, %16 : vector<16x128xf32>
      %c0_14 = arith.constant 0 : index
      %c0_15 = arith.constant 0 : index
      %18 = vector.load %arg6[%c0_14, %c0_15] : memref<16x128xf32, #tpu.memory_space<vmem>>, vector<16x128xf32>
      tpu.vector_store %arg6[%c0_14, %c0_15], %17 {strides = array<i32>} : memref<16x128xf32, #tpu.memory_space<vmem>>, vector<16x128xf32>,
    } else {
    }
    return
  }
  func.func @transform_0(%arg0: i32, %arg1: i32, %arg2: i32) -> (i32, i32) {
    %c0_i32 = arith.constant 0 : i32
    return %arg0, %arg2 : i32, i32
  }
  func.func @transform_1(%arg0: i32, %arg1: i32, %arg2: i32) -> (i32, i32) {
    %c0_i32 = arith.constant 0 : i32
    return %arg2, %arg1 : i32, i32
  }
  func.func @transform_2(%arg0: i32, %arg1: i32, %arg2: i32) -> (i32, i32) {
    %c0_i32 = arith.constant 0 : i32
    %c0_i32_0 = arith.constant 0 : i32
    return %c0_i32, %arg1 : i32, i32
  }
  func.func @transform_3(%arg0: i32, %arg1: i32, %arg2: i32) -> (i32, i32) {
    %c0_i32 = arith.constant 0 : i32
    return %arg0, %arg1 : i32, i32
  }
}

module attributes {stable_mosaic.version = 11 : i64} {
  func.func @_fused_fc_kernel(%arg0: i32, %arg1: i32, %arg2: memref<16x128xbf16, #tpu.memory_space<vmem>>, %arg3: memref<128x512xbf16, #tpu.memory_space<vmem>>, %arg4: memref<1x512xf32, #tpu.memory_space<vmem>>, %arg5: memref<512x128xbf16, #tpu.memory_space<vmem>>, %arg6: memref<1x128xf32, #tpu.memory_space<vmem>>, %arg7: memref<16x128xf32, #tpu.memory_space<vmem>>, %arg8: memref<16x512xf32, #tpu.memory_space<vmem>>) attributes {dimension_semantics = [#tpu.dimension_semantics<parallel>, #tpu.dimension_semantics<arbitrary>], iteration_bounds = array<i64: 1, 1>, scalar_prefetch = 0 : i64, scratch_operands = 1 : i64, tpu.core_type = #tpu.core_type<tc>, window_params = [{transform_indices = @transform_0, window_bounds = array<i64: 16, 128>}, {transform_indices = @transform_1, window_bounds = array<i64: 128, 512>}, {pipeline_mode = #tpu.pipeline_mode<synchronous>, transform_indices = @transform_2, window_bounds = array<i64: 1, 512>}, {pipeline_mode = #tpu.pipeline_mode<synchronous>, transform_indices = @transform_3, window_bounds = array<i64: 512, 128>}, {pipeline_mode = #tpu.pipeline_mode<synchronous>, transform_indices = @transform_4, window_bounds = array<i64: 1, 128>}, {transform_indices = @transform_5, window_bounds = array<i64: 16, 128>}]} {
    %c0_i32 = arith.constant 0 : i32
    %0 = arith.cmpi eq, %arg1, %c0_i32 : i32
    %1 = arith.extui %0 : i1 to i32
    %c0_i32_0 = arith.constant 0 : i32
    %2 = arith.cmpi ne, %1, %c0_i32_0 : i32
    scf.if %2 {
      %cst_10 = arith.constant 0.000000e+00 : f32
      %12 = vector.broadcast %cst_10 : f32 to vector<16x512xf32>
      %c0_11 = arith.constant 0 : index
      %c0_12 = arith.constant 0 : index
      %13 = vector.load %arg8[%c0_11, %c0_12] : memref<16x512xf32, #tpu.memory_space<vmem>>, vector<16x512xf32>
      tpu.vector_store %arg8[%c0_11, %c0_12], %12 {strides = array<i32>} : memref<16x512xf32, #tpu.memory_space<vmem>>, vector<16x512xf32>,
    } else {
    }
    %c0 = arith.constant 0 : index
    %c0_1 = arith.constant 0 : index
    %3 = vector.load %arg8[%c0, %c0_1] : memref<16x512xf32, #tpu.memory_space<vmem>>, vector<16x512xf32>
    %c0_2 = arith.constant 0 : index
    %c0_3 = arith.constant 0 : index
    %4 = vector.load %arg2[%c0_2, %c0_3] : memref<16x128xbf16, #tpu.memory_space<vmem>>, vector<16x128xbf16>
    %c0_4 = arith.constant 0 : index
    %c0_5 = arith.constant 0 : index
    %5 = vector.load %arg3[%c0_4, %c0_5] : memref<128x512xbf16, #tpu.memory_space<vmem>>, vector<128x512xbf16>
    %cst = arith.constant dense<0.000000e+00> : vector<16x512xf32>
    %6 = tpu.matmul %4, %5, %cst {dimension_numbers = #tpu.dot_dimension_numbers<[1], [0], [0], [1], [0, 0, 1, 1], [], []>} : vector<16x128xbf16>, vector<128x512xbf16>, vector<16x512xf32> -> vector<16x512xf32>
    %7 = arith.addf %3, %6 : vector<16x512xf32>
    %c0_6 = arith.constant 0 : index
    %c0_7 = arith.constant 0 : index
    %8 = vector.load %arg8[%c0_6, %c0_7] : memref<16x512xf32, #tpu.memory_space<vmem>>, vector<16x512xf32>
    tpu.vector_store %arg8[%c0_6, %c0_7], %7 {strides = array<i32>} : memref<16x512xf32, #tpu.memory_space<vmem>>, vector<16x512xf32>,
    %c0_i32_8 = arith.constant 0 : i32
    %9 = arith.cmpi eq, %arg1, %c0_i32_8 : i32
    %10 = arith.extui %9 : i1 to i32
    %c0_i32_9 = arith.constant 0 : i32
    %11 = arith.cmpi ne, %10, %c0_i32_9 : i32
    scf.if %11 {
      %c0_10 = arith.constant 0 : index
      %c0_11 = arith.constant 0 : index
      %12 = vector.load %arg8[%c0_10, %c0_11] : memref<16x512xf32, #tpu.memory_space<vmem>>, vector<16x512xf32>
      %c0_12 = arith.constant 0 : index
      %c0_13 = arith.constant 0 : index
      %13 = vector.load %arg4[%c0_12, %c0_13] : memref<1x512xf32, #tpu.memory_space<vmem>>, vector<1x512xf32>
      %14 = vector.broadcast %13 : vector<1x512xf32> to vector<16x512xf32>
      %15 = arith.addf %12, %14 : vector<16x512xf32>
      %cst_14 = arith.constant 0.000000e+00 : f32
      %16 = vector.broadcast %cst_14 : f32 to vector<16x512xf32>
      %17 = arith.maximumf %15, %16 : vector<16x512xf32>
      %18 = arith.truncf %17 : vector<16x512xf32> to vector<16x512xbf16>
      %c0_15 = arith.constant 0 : index
      %c0_16 = arith.constant 0 : index
      %19 = vector.load %arg5[%c0_15, %c0_16] : memref<512x128xbf16, #tpu.memory_space<vmem>>, vector<512x128xbf16>
      %cst_17 = arith.constant dense<0.000000e+00> : vector<16x128xf32>
      %20 = tpu.matmul %18, %19, %cst_17 {dimension_numbers = #tpu.dot_dimension_numbers<[1], [0], [0], [1], [0, 0, 1, 1], [], []>} : vector<16x512xbf16>, vector<512x128xbf16>, vector<16x128xf32> -> vector<16x128xf32>
      %c0_18 = arith.constant 0 : index
      %c0_19 = arith.constant 0 : index
      %21 = vector.load %arg6[%c0_18, %c0_19] : memref<1x128xf32, #tpu.memory_space<vmem>>, vector<1x128xf32>
      %22 = vector.broadcast %21 : vector<1x128xf32> to vector<16x128xf32>
      %23 = arith.addf %20, %22 : vector<16x128xf32>
      %c0_20 = arith.constant 0 : index
      %c0_21 = arith.constant 0 : index
      %24 = vector.load %arg7[%c0_20, %c0_21] : memref<16x128xf32, #tpu.memory_space<vmem>>, vector<16x128xf32>
      tpu.vector_store %arg7[%c0_20, %c0_21], %23 {strides = array<i32>} : memref<16x128xf32, #tpu.memory_space<vmem>>, vector<16x128xf32>,
    } else {
    }
    return
  }
  func.func @transform_0(%arg0: i32, %arg1: i32) -> (i32, i32) {
    %c0_i32 = arith.constant 0 : i32
    return %arg0, %arg1 : i32, i32
  }
  func.func @transform_1(%arg0: i32, %arg1: i32) -> (i32, i32) {
    %c0_i32 = arith.constant 0 : i32
    %c0_i32_0 = arith.constant 0 : i32
    return %arg1, %c0_i32 : i32, i32
  }
  func.func @transform_2(%arg0: i32, %arg1: i32) -> (i32, i32) {
    %c0_i32 = arith.constant 0 : i32
    %c0_i32_0 = arith.constant 0 : i32
    %c0_i32_1 = arith.constant 0 : i32
    return %c0_i32, %c0_i32_0 : i32, i32
  }
  func.func @transform_3(%arg0: i32, %arg1: i32) -> (i32, i32) {
    %c0_i32 = arith.constant 0 : i32
    %c0_i32_0 = arith.constant 0 : i32
    %c0_i32_1 = arith.constant 0 : i32
    return %c0_i32, %c0_i32_0 : i32, i32
  }
  func.func @transform_4(%arg0: i32, %arg1: i32) -> (i32, i32) {
    %c0_i32 = arith.constant 0 : i32
    %c0_i32_0 = arith.constant 0 : i32
    %c0_i32_1 = arith.constant 0 : i32
    return %c0_i32, %c0_i32_0 : i32, i32
  }
  func.func @transform_5(%arg0: i32, %arg1: i32) -> (i32, i32) {
    %c0_i32 = arith.constant 0 : i32
    %c0_i32_0 = arith.constant 0 : i32
    return %arg0, %c0_i32 : i32, i32
  }
}

</mosaic_0001>

<llo_original>
// kernel: dqn_forward.4
$region0: #{dqn_forward.4}
  #allocation0 [shape = 'u32[]', space=smem, size = 0x4, offset = 0x4, fixed_abs, tag = 'smem constant byte address 0x4 - core index']
  #allocation1 [shape = 'u32[144,128]{1,0:T(1,128)}', space=vmem, size = 0x12000, scoped, tag = 'internal scratch']
  #allocation2 [shape = 'f32[128,128]{1,0:T(8,128)}', space=vmem, size = 0x10000, scoped, tag = 'scratch operand']
  %s0 = inlined_call_operand.vmem [shape: bf16[128,256], index: 0, kind: input, shape index: {}]
  %s1 = inlined_call_operand.vmem [shape: bf16[256,128], index: 1, kind: input, shape index: {}]
  %s2 = inlined_call_operand.vmem [shape: f32[1,128], index: 2, kind: input, shape index: {}]
  %s3 = inlined_call_operand.vmem [shape: f32[128,128], index: 3, kind: output, shape index: {}]
  %s4 = sld [smem:[#allocation0]]
  $region30: #{dqn_forward.4} parent=0
    _
  %s6 = ssub.s32 1, %s4
  %s7 = scalar_select 0, %s6, %s4
  // Predicated region
  $region2: #{dqn_forward.4} parent=0 // pred_check
    _
  $region3: #{dqn_forward.4} parent=0 // pred_check_branch
    %9 = sbr.rel (0) target = $region5
  $region4: #{dqn_forward.4} parent=0 // pred_region
    _
  $region5: #{dqn_forward.4} parent=0 // pred_fallthru
    _
  // Predicated region
  $region6: #{dqn_forward.4} parent=0 // pred_check
    _
  $region7: #{dqn_forward.4} parent=0 // pred_check_branch
    %11 = sbr.rel (0) target = $region9
  $region8: #{dqn_forward.4} parent=0 // pred_region
    _
  $region9: #{dqn_forward.4} parent=0 // pred_fallthru
    _
  // Predicated region
  $region10: #{dqn_forward.4} parent=0 // pred_check
    _
  $region11: #{dqn_forward.4} parent=0 // pred_check_branch
    %13 = sbr.rel (0) target = $region13
  $region12: #{dqn_forward.4} parent=0 // pred_region
    _
  $region13: #{dqn_forward.4} parent=0 // pred_fallthru
    _
  %p15 = scmp.eq.s32.totalorder 0, 0
  // Predicated region
  $region14: #{dqn_forward.4} parent=0 // pred_check
    %p16 = pneg %p15
  $region15: #{dqn_forward.4} parent=0 // pred_check_branch
    %18 = sbr.rel (%p16) target = $region17
  $region16: #{dqn_forward.4} parent=0 // pred_region
    %19 = vst [vmem:[#allocation2] sm:$0xff] 0.0
    %20 = vst [vmem:[#allocation2 + $0x8] sm:$0xff] 0.0
    %21 = vst [vmem:[#allocation2 + $0x10] sm:$0xff] 0.0
    %22 = vst [vmem:[#allocation2 + $0x18] sm:$0xff] 0.0
    %23 = vst [vmem:[#allocation2 + $0x20] sm:$0xff] 0.0
    %24 = vst [vmem:[#allocation2 + $0x28] sm:$0xff] 0.0
    %25 = vst [vmem:[#allocation2 + $0x30] sm:$0xff] 0.0
    %26 = vst [vmem:[#allocation2 + $0x38] sm:$0xff] 0.0
    %27 = vst [vmem:[#allocation2 + $0x40] sm:$0xff] 0.0
    %28 = vst [vmem:[#allocation2 + $0x48] sm:$0xff] 0.0
    %29 = vst [vmem:[#allocation2 + $0x50] sm:$0xff] 0.0
    %30 = vst [vmem:[#allocation2 + $0x58] sm:$0xff] 0.0
    %31 = vst [vmem:[#allocation2 + $0x60] sm:$0xff] 0.0
    %32 = vst [vmem:[#allocation2 + $0x68] sm:$0xff] 0.0
    %33 = vst [vmem:[#allocation2 + $0x70] sm:$0xff] 0.0
    %34 = vst [vmem:[#allocation2 + $0x78] sm:$0xff] 0.0
  $region17: #{dqn_forward.4} parent=0 // pred_fallthru
    _
  %v35 = vld [vmem:[#allocation2] sm:$0xff]
  %v36 = vld [vmem:[#allocation2 + $0x8] sm:$0xff]
  %v37 = vld [vmem:[#allocation2 + $0x10] sm:$0xff]
  %v38 = vld [vmem:[#allocation2 + $0x18] sm:$0xff]
  %v39 = vld [vmem:[#allocation2 + $0x20] sm:$0xff]
  %v40 = vld [vmem:[#allocation2 + $0x28] sm:$0xff]
  %v41 = vld [vmem:[#allocation2 + $0x30] sm:$0xff]
  %v42 = vld [vmem:[#allocation2 + $0x38] sm:$0xff]
  %v43 = vld [vmem:[#allocation2 + $0x40] sm:$0xff]
  %v44 = vld [vmem:[#allocation2 + $0x48] sm:$0xff]
  %v45 = vld [vmem:[#allocation2 + $0x50] sm:$0xff]
  %v46 = vld [vmem:[#allocation2 + $0x58] sm:$0xff]
  %v47 = vld [vmem:[#allocation2 + $0x60] sm:$0xff]
  %v48 = vld [vmem:[#allocation2 + $0x68] sm:$0xff]
  %v49 = vld [vmem:[#allocation2 + $0x70] sm:$0xff]
  %v50 = vld [vmem:[#allocation2 + $0x78] sm:$0xff]
  %v51 = vld [vmem:[%s0] sm:$0xff]
  %v52 = vld [vmem:[%s0 + $0x8] sm:$0xff]
  %v53 = vld [vmem:[%s0 + $0x10] sm:$0xff]
  %v54 = vld [vmem:[%s0 + $0x18] sm:$0xff]
  %v55 = vld [vmem:[%s0 + $0x20] sm:$0xff]
  %v56 = vld [vmem:[%s0 + $0x28] sm:$0xff]
  %v57 = vld [vmem:[%s0 + $0x30] sm:$0xff]
  %v58 = vld [vmem:[%s0 + $0x38] sm:$0xff]
  %v59 = vld [vmem:[%s0 + $0x40] sm:$0xff]
  %v60 = vld [vmem:[%s0 + $0x48] sm:$0xff]
  %v61 = vld [vmem:[%s0 + $0x50] sm:$0xff]
  %v62 = vld [vmem:[%s0 + $0x58] sm:$0xff]
  %v63 = vld [vmem:[%s0 + $0x60] sm:$0xff]
  %v64 = vld [vmem:[%s0 + $0x68] sm:$0xff]
  %v65 = vld [vmem:[%s0 + $0x70] sm:$0xff]
  %v66 = vld [vmem:[%s0 + $0x78] sm:$0xff]
  %v67 = vld [vmem:[%s1] sm:$0xf]
  %v68 = vld [vmem:[%s1 + $0x4] sm:$0xf]
  %v69 = vld [vmem:[%s1 + $0x8] sm:$0xf]
  %v70 = vld [vmem:[%s1 + $0xc] sm:$0xf]
  %v71 = vld [vmem:[%s1 + $0x10] sm:$0xf]
  %v72 = vld [vmem:[%s1 + $0x14] sm:$0xf]
  %v73 = vld [vmem:[%s1 + $0x18] sm:$0xf]
  %v74 = vld [vmem:[%s1 + $0x1c] sm:$0xf]
  %v75 = vld [vmem:[%s1 + $0x20] sm:$0xf]
  %v76 = vld [vmem:[%s1 + $0x24] sm:$0xf]
  %v77 = vld [vmem:[%s1 + $0x28] sm:$0xf]
  %v78 = vld [vmem:[%s1 + $0x2c] sm:$0xf]
  %v79 = vld [vmem:[%s1 + $0x30] sm:$0xf]
  %v80 = vld [vmem:[%s1 + $0x34] sm:$0xf]
  %v81 = vld [vmem:[%s1 + $0x38] sm:$0xf]
  %v82 = vld [vmem:[%s1 + $0x3c] sm:$0xf]
  %v83 = vld [vmem:[%s1 + $0x40] sm:$0xf]
  %v84 = vld [vmem:[%s1 + $0x44] sm:$0xf]
  %v85 = vld [vmem:[%s1 + $0x48] sm:$0xf]
  %v86 = vld [vmem:[%s1 + $0x4c] sm:$0xf]
  %v87 = vld [vmem:[%s1 + $0x50] sm:$0xf]
  %v88 = vld [vmem:[%s1 + $0x54] sm:$0xf]
  %v89 = vld [vmem:[%s1 + $0x58] sm:$0xf]
  %v90 = vld [vmem:[%s1 + $0x5c] sm:$0xf]
  %v91 = vld [vmem:[%s1 + $0x60] sm:$0xf]
  %v92 = vld [vmem:[%s1 + $0x64] sm:$0xf]
  %v93 = vld [vmem:[%s1 + $0x68] sm:$0xf]
  %v94 = vld [vmem:[%s1 + $0x6c] sm:$0xf]
  %v95 = vld [vmem:[%s1 + $0x70] sm:$0xf]
  %v96 = vld [vmem:[%s1 + $0x74] sm:$0xf]
  %v97 = vld [vmem:[%s1 + $0x78] sm:$0xf]
  %v98 = vld [vmem:[%s1 + $0x7c] sm:$0xf]
  %v115 = vunpack.c.l.b16 %v51
  %v116 = vunpack.c.h.b16 %v51
  %v117 = vunpack.c.l.b16 %v52
  %v118 = vunpack.c.h.b16 %v52
  %v119 = vunpack.c.l.b16 %v53
  %v120 = vunpack.c.h.b16 %v53
  %v121 = vunpack.c.l.b16 %v54
  %v122 = vunpack.c.h.b16 %v54
  %v123 = vunpack.c.l.b16 %v55
  %v124 = vunpack.c.h.b16 %v55
  %v125 = vunpack.c.l.b16 %v56
  %v126 = vunpack.c.h.b16 %v56
  %v127 = vunpack.c.l.b16 %v57
  %v128 = vunpack.c.h.b16 %v57
  %v129 = vunpack.c.l.b16 %v58
  %v130 = vunpack.c.h.b16 %v58
  %v131 = vunpack.c.l.b16 %v59
  %v132 = vunpack.c.h.b16 %v59
  %v133 = vunpack.c.l.b16 %v60
  %v134 = vunpack.c.h.b16 %v60
  %v135 = vunpack.c.l.b16 %v61
  %v136 = vunpack.c.h.b16 %v61
  %v137 = vunpack.c.l.b16 %v62
  %v138 = vunpack.c.h.b16 %v62
  %v139 = vunpack.c.l.b16 %v63
  %v140 = vunpack.c.h.b16 %v63
  %v141 = vunpack.c.l.b16 %v64
  %v142 = vunpack.c.h.b16 %v64
  %v143 = vunpack.c.l.b16 %v65
  %v144 = vunpack.c.h.b16 %v65
  %v145 = vunpack.c.l.b16 %v66
  %v146 = vunpack.c.h.b16 %v66
  %v147 = vpack.c.b16 %v117, %v115
  %v148 = vpack.c.b16 %v118, %v116
  %v149 = vpack.c.b16 %v121, %v119
  %v150 = vpack.c.b16 %v122, %v120
  %v151 = vpack.c.b16 %v125, %v123
  %v152 = vpack.c.b16 %v126, %v124
  %v153 = vpack.c.b16 %v129, %v127
  %v154 = vpack.c.b16 %v130, %v128
  %v155 = vpack.c.b16 %v133, %v131
  %v156 = vpack.c.b16 %v134, %v132
  %v157 = vpack.c.b16 %v137, %v135
  %v158 = vpack.c.b16 %v138, %v136
  %v159 = vpack.c.b16 %v141, %v139
  %v160 = vpack.c.b16 %v142, %v140
  %v161 = vpack.c.b16 %v145, %v143
  %v162 = vpack.c.b16 %v146, %v144
  %v211 = vunpack.c.l.b16 %v67
  %v212 = vunpack.c.l.b16 %v68
  %v213 = vunpack.c.l.b16 %v69
  %v214 = vunpack.c.l.b16 %v70
  %v215 = vunpack.c.l.b16 %v71
  %v216 = vunpack.c.l.b16 %v72
  %v217 = vunpack.c.l.b16 %v73
  %v218 = vunpack.c.l.b16 %v74
  %v219 = vunpack.c.l.b16 %v75
  %v220 = vunpack.c.l.b16 %v76
  %v221 = vunpack.c.l.b16 %v77
  %v222 = vunpack.c.l.b16 %v78
  %v223 = vunpack.c.l.b16 %v79
  %v224 = vunpack.c.l.b16 %v80
  %v225 = vunpack.c.l.b16 %v81
  %v226 = vunpack.c.l.b16 %v82
  %v227 = vunpack.c.l.b16 %v83
  %v228 = vunpack.c.l.b16 %v84
  %v229 = vunpack.c.l.b16 %v85
  %v230 = vunpack.c.l.b16 %v86
  %v231 = vunpack.c.l.b16 %v87
  %v232 = vunpack.c.l.b16 %v88
  %v233 = vunpack.c.l.b16 %v89
  %v234 = vunpack.c.l.b16 %v90
  %v235 = vunpack.c.l.b16 %v91
  %v236 = vunpack.c.l.b16 %v92
  %v237 = vunpack.c.l.b16 %v93
  %v238 = vunpack.c.l.b16 %v94
  %v239 = vunpack.c.l.b16 %v95
  %v240 = vunpack.c.l.b16 %v96
  %v241 = vunpack.c.l.b16 %v97
  %v242 = vunpack.c.l.b16 %v98
  %v243 = vpack.c.b16 %v212, %v211
  %v244 = vpack.c.b16 %v214, %v213
  %v245 = vpack.c.b16 %v216, %v215
  %v246 = vpack.c.b16 %v218, %v217
  %v247 = vpack.c.b16 %v220, %v219
  %v248 = vpack.c.b16 %v222, %v221
  %v249 = vpack.c.b16 %v224, %v223
  %v250 = vpack.c.b16 %v226, %v225
  %v251 = vpack.c.b16 %v228, %v227
  %v252 = vpack.c.b16 %v230, %v229
  %v253 = vpack.c.b16 %v232, %v231
  %v254 = vpack.c.b16 %v234, %v233
  %v255 = vpack.c.b16 %v236, %v235
  %v256 = vpack.c.b16 %v238, %v237
  %v257 = vpack.c.b16 %v240, %v239
  %v258 = vpack.c.b16 %v242, %v241
  %275 = vmatprep.subr.bf16.mxu0 0
  %276 = vmatpush1.bf16.msra.mxu0 %v250
  %277 = vmatprep.subr.bf16.mxu0 0
  %278 = vmatpush1.bf16.msra.mxu0 %v249
  %279 = vmatprep.subr.bf16.mxu0 0
  %280 = vmatpush1.bf16.msra.mxu0 %v248
  %281 = vmatprep.subr.bf16.mxu0 0
  %282 = vmatpush1.bf16.msra.mxu0 %v247
  %283 = vmatprep.subr.bf16.mxu0 0
  %284 = vmatpush1.bf16.msra.mxu0 %v246
  %285 = vmatprep.subr.bf16.mxu0 0
  %286 = vmatpush1.bf16.msra.mxu0 %v245
  %287 = vmatprep.subr.bf16.mxu0 0
  %288 = vmatpush1.bf16.msra.mxu0 %v244
  %289 = vmatprep.subr.bf16.mxu0 0
  %290 = vmatpush1.bf16.msra.mxu0 %v243
  %291 = vmatprep.subr.bf16.mxu0 0
  %292 = vmatpush2.bf16.msra.mxu0 %v258
  %293 = vmatprep.subr.bf16.mxu0 0
  %294 = vmatpush2.bf16.msra.mxu0 %v257
  %295 = vmatprep.subr.bf16.mxu0 0
  %296 = vmatpush2.bf16.msra.mxu0 %v256
  %297 = vmatprep.subr.bf16.mxu0 0
  %298 = vmatpush2.bf16.msra.mxu0 %v255
  %299 = vmatprep.subr.bf16.mxu0 0
  %300 = vmatpush2.bf16.msra.mxu0 %v254
  %301 = vmatprep.subr.bf16.mxu0 0
  %302 = vmatpush2.bf16.msra.mxu0 %v253
  %303 = vmatprep.subr.bf16.mxu0 0
  %304 = vmatpush2.bf16.msra.mxu0 %v252
  %305 = vmatprep.subr.bf16.mxu0 0
  %306 = vmatpush2.bf16.msra.mxu0 %v251
  %307 = vmatprep.mubr.bf16.mxu0 %v148
  %308 = vmatmul.mubr.bf16.gmra.mxu0 %v147
  %v309 = vpop.f32.mrf.mxu0
  %v310 = vadd.f32 0.0, %v309
  %v311 = vpop.f32.mrf.mxu0
  %v312 = vpop.f32.mrf.mxu0
  %v313 = vadd.f32 0.0, %v312
  %v314 = vpop.f32.mrf.mxu0
  %315 = vmatprep.mubr.bf16.mxu0 %v150
  %316 = vmatmul.mubr.bf16.gmra.mxu0 %v149
  %v317 = vpop.f32.mrf.mxu0
  %v318 = vadd.f32 0.0, %v317
  %v319 = vpop.f32.mrf.mxu0
  %v320 = vpop.f32.mrf.mxu0
  %v321 = vadd.f32 0.0, %v320
  %v322 = vpop.f32.mrf.mxu0
  %323 = vmatprep.mubr.bf16.mxu0 %v152
  %324 = vmatmul.mubr.bf16.gmra.mxu0 %v151
  %v325 = vpop.f32.mrf.mxu0
  %v326 = vadd.f32 0.0, %v325
  %v327 = vpop.f32.mrf.mxu0
  %v328 = vpop.f32.mrf.mxu0
  %v329 = vadd.f32 0.0, %v328
  %v330 = vpop.f32.mrf.mxu0
  %331 = vmatprep.mubr.bf16.mxu0 %v154
  %332 = vmatmul.mubr.bf16.gmra.mxu0 %v153
  %v333 = vpop.f32.mrf.mxu0
  %v334 = vadd.f32 0.0, %v333
  %v335 = vpop.f32.mrf.mxu0
  %v336 = vpop.f32.mrf.mxu0
  %v337 = vadd.f32 0.0, %v336
  %v338 = vpop.f32.mrf.mxu0
  %339 = vmatprep.mubr.bf16.mxu0 %v156
  %340 = vmatmul.mubr.bf16.gmra.mxu0 %v155
  %v341 = vpop.f32.mrf.mxu0
  %v342 = vadd.f32 0.0, %v341
  %v343 = vpop.f32.mrf.mxu0
  %v344 = vpop.f32.mrf.mxu0
  %v345 = vadd.f32 0.0, %v344
  %v346 = vpop.f32.mrf.mxu0
  %347 = vmatprep.mubr.bf16.mxu0 %v158
  %348 = vmatmul.mubr.bf16.gmra.mxu0 %v157
  %v349 = vpop.f32.mrf.mxu0
  %v350 = vadd.f32 0.0, %v349
  %v351 = vpop.f32.mrf.mxu0
  %v352 = vpop.f32.mrf.mxu0
  %v353 = vadd.f32 0.0, %v352
  %v354 = vpop.f32.mrf.mxu0
  %355 = vmatprep.mubr.bf16.mxu0 %v160
  %356 = vmatmul.mubr.bf16.gmra.mxu0 %v159
  %v357 = vpop.f32.mrf.mxu0
  %v358 = vadd.f32 0.0, %v357
  %v359 = vpop.f32.mrf.mxu0
  %v360 = vpop.f32.mrf.mxu0
  %v361 = vadd.f32 0.0, %v360
  %v362 = vpop.f32.mrf.mxu0
  %363 = vmatprep.mubr.bf16.mxu0 %v162
  %364 = vmatmul.mubr.bf16.gmra.mxu0 %v161
  %v365 = vpop.f32.mrf.mxu0
  %v366 = vadd.f32 0.0, %v365
  %v367 = vpop.f32.mrf.mxu0
  %v368 = vpop.f32.mrf.mxu0
  %v369 = vadd.f32 0.0, %v368
  %v370 = vpop.f32.mrf.mxu0
  %371 = vdwg.mxu0
  %v372 = vadd.f32 %v35, %v310
  %v373 = vadd.f32 %v36, %v313
  %v374 = vadd.f32 %v37, %v318
  %v375 = vadd.f32 %v38, %v321
  %v376 = vadd.f32 %v39, %v326
  %v377 = vadd.f32 %v40, %v329
  %v378 = vadd.f32 %v41, %v334
  %v379 = vadd.f32 %v42, %v337
  %v380 = vadd.f32 %v43, %v342
  %v381 = vadd.f32 %v44, %v345
  %v382 = vadd.f32 %v45, %v350
  %v383 = vadd.f32 %v46, %v353
  %v384 = vadd.f32 %v47, %v358
  %v385 = vadd.f32 %v48, %v361
  %v386 = vadd.f32 %v49, %v366
  %v387 = vadd.f32 %v50, %v369
  %388 = vst [vmem:[#allocation2] sm:$0xff] %v372
  %389 = vst [vmem:[#allocation2 + $0x8] sm:$0xff] %v373
  %390 = vst [vmem:[#allocation2 + $0x10] sm:$0xff] %v374
  %391 = vst [vmem:[#allocation2 + $0x18] sm:$0xff] %v375
  %392 = vst [vmem:[#allocation2 + $0x20] sm:$0xff] %v376
  %393 = vst [vmem:[#allocation2 + $0x28] sm:$0xff] %v377
  %394 = vst [vmem:[#allocation2 + $0x30] sm:$0xff] %v378
  %395 = vst [vmem:[#allocation2 + $0x38] sm:$0xff] %v379
  %396 = vst [vmem:[#allocation2 + $0x40] sm:$0xff] %v380
  %397 = vst [vmem:[#allocation2 + $0x48] sm:$0xff] %v381
  %398 = vst [vmem:[#allocation2 + $0x50] sm:$0xff] %v382
  %399 = vst [vmem:[#allocation2 + $0x58] sm:$0xff] %v383
  %400 = vst [vmem:[#allocation2 + $0x60] sm:$0xff] %v384
  %401 = vst [vmem:[#allocation2 + $0x68] sm:$0xff] %v385
  %402 = vst [vmem:[#allocation2 + $0x70] sm:$0xff] %v386
  %403 = vst [vmem:[#allocation2 + $0x78] sm:$0xff] %v387
  // Predicated region
  $region18: #{dqn_forward.4} parent=0 // pred_check
    %p404 = pneg %p15
  $region19: #{dqn_forward.4} parent=0 // pred_check_branch
    %406 = sbr.rel (%p404) target = $region21
  $region20: #{dqn_forward.4} parent=0 // pred_region
    %v407 = vld [vmem:[#allocation2] sm:$0xff]
    %v408 = vld [vmem:[#allocation2 + $0x8] sm:$0xff]
    %v409 = vld [vmem:[#allocation2 + $0x10] sm:$0xff]
    %v410 = vld [vmem:[#allocation2 + $0x18] sm:$0xff]
    %v411 = vld [vmem:[#allocation2 + $0x20] sm:$0xff]
    %v412 = vld [vmem:[#allocation2 + $0x28] sm:$0xff]
    %v413 = vld [vmem:[#allocation2 + $0x30] sm:$0xff]
    %v414 = vld [vmem:[#allocation2 + $0x38] sm:$0xff]
    %v415 = vld [vmem:[#allocation2 + $0x40] sm:$0xff]
    %v416 = vld [vmem:[#allocation2 + $0x48] sm:$0xff]
    %v417 = vld [vmem:[#allocation2 + $0x50] sm:$0xff]
    %v418 = vld [vmem:[#allocation2 + $0x58] sm:$0xff]
    %v419 = vld [vmem:[#allocation2 + $0x60] sm:$0xff]
    %v420 = vld [vmem:[#allocation2 + $0x68] sm:$0xff]
    %v421 = vld [vmem:[#allocation2 + $0x70] sm:$0xff]
    %v422 = vld [vmem:[#allocation2 + $0x78] sm:$0xff]
    %v423 = vld [vmem:[%s2] sm:$0x1]
    %v425 = vlaneseq
    %v426 = vshrl.u32 %v425, 7
    %v427 = vsub.s32 0, %v426
    %v428 = vrot.slane %v423, %v427
    %v430 = vadd.f32 %v407, %v428
    %v431 = vadd.f32 %v408, %v428
    %v432 = vadd.f32 %v409, %v428
    %v433 = vadd.f32 %v410, %v428
    %v434 = vadd.f32 %v411, %v428
    %v435 = vadd.f32 %v412, %v428
    %v436 = vadd.f32 %v413, %v428
    %v437 = vadd.f32 %v414, %v428
    %v438 = vadd.f32 %v415, %v428
    %v439 = vadd.f32 %v416, %v428
    %v440 = vadd.f32 %v417, %v428
    %v441 = vadd.f32 %v418, %v428
    %v442 = vadd.f32 %v419, %v428
    %v443 = vadd.f32 %v420, %v428
    %v444 = vadd.f32 %v421, %v428
    %v445 = vadd.f32 %v422, %v428
    %v446 = vmax.f32 %v430, 0.0
    %v447 = vmax.f32 %v431, 0.0
    %v448 = vmax.f32 %v432, 0.0
    %v449 = vmax.f32 %v433, 0.0
    %v450 = vmax.f32 %v434, 0.0
    %v451 = vmax.f32 %v435, 0.0
    %v452 = vmax.f32 %v436, 0.0
    %v453 = vmax.f32 %v437, 0.0
    %v454 = vmax.f32 %v438, 0.0
    %v455 = vmax.f32 %v439, 0.0
    %v456 = vmax.f32 %v440, 0.0
    %v457 = vmax.f32 %v441, 0.0
    %v458 = vmax.f32 %v442, 0.0
    %v459 = vmax.f32 %v443, 0.0
    %v460 = vmax.f32 %v444, 0.0
    %v461 = vmax.f32 %v445, 0.0
    %462 = vst [vmem:[%s3] sm:$0xff] %v446
    %463 = vst [vmem:[%s3 + $0x8] sm:$0xff] %v447
    %464 = vst [vmem:[%s3 + $0x10] sm:$0xff] %v448
    %465 = vst [vmem:[%s3 + $0x18] sm:$0xff] %v449
    %466 = vst [vmem:[%s3 + $0x20] sm:$0xff] %v450
    %467 = vst [vmem:[%s3 + $0x28] sm:$0xff] %v451
    %468 = vst [vmem:[%s3 + $0x30] sm:$0xff] %v452
    %469 = vst [vmem:[%s3 + $0x38] sm:$0xff] %v453
    %470 = vst [vmem:[%s3 + $0x40] sm:$0xff] %v454
    %471 = vst [vmem:[%s3 + $0x48] sm:$0xff] %v455
    %472 = vst [vmem:[%s3 + $0x50] sm:$0xff] %v456
    %473 = vst [vmem:[%s3 + $0x58] sm:$0xff] %v457
    %474 = vst [vmem:[%s3 + $0x60] sm:$0xff] %v458
    %475 = vst [vmem:[%s3 + $0x68] sm:$0xff] %v459
    %476 = vst [vmem:[%s3 + $0x70] sm:$0xff] %v460
    %477 = vst [vmem:[%s3 + $0x78] sm:$0xff] %v461
  $region21: #{dqn_forward.4} parent=0 // pred_fallthru
    _
  // Predicated region
  $region22: #{dqn_forward.4} parent=0 // pred_check
    _
  $region23: #{dqn_forward.4} parent=0 // pred_check_branch
    %479 = sbr.rel (0) target = $region25
  $region24: #{dqn_forward.4} parent=0 // pred_region
    _
  $region25: #{dqn_forward.4} parent=0 // pred_fallthru
    _
  // Predicated region
  $region26: #{dqn_forward.4} parent=0 // pred_check
    _
  $region27: #{dqn_forward.4} parent=0 // pred_check_branch
    %481 = sbr.rel (0) target = $region29
  $region28: #{dqn_forward.4} parent=0 // pred_region
    _
  $region29: #{dqn_forward.4} parent=0 // pred_fallthru
    _

// kernel: dqn_forward.5
$region0: #{dqn_forward.5}
  #allocation0 [shape = 'u32[]', space=smem, size = 0x4, offset = 0x4, fixed_abs, tag = 'smem constant byte address 0x4 - core index']
  #allocation1 [shape = 'u32[144,128]{1,0:T(1,128)}', space=vmem, size = 0x12000, scoped, tag = 'internal scratch']
  #allocation2 [shape = 'f32[32,128]{1,0:T(8,128)}', space=vmem, size = 0x4000, scoped, tag = 'scratch operand']
  %s0 = inlined_call_operand.vmem [shape: bf16[32,512], index: 0, kind: input, shape index: {}]
  %s1 = inlined_call_operand.vmem [shape: bf16[512,128], index: 1, kind: input, shape index: {}]
  %s2 = inlined_call_operand.vmem [shape: f32[1,128], index: 2, kind: input, shape index: {}]
  %s3 = inlined_call_operand.vmem [shape: f32[32,128], index: 3, kind: output, shape index: {}]
  %s4 = sld [smem:[#allocation0]]
  $region30: #{dqn_forward.5} parent=0
    _
  %s6 = ssub.s32 1, %s4
  %s7 = scalar_select 0, %s6, %s4
  // Predicated region
  $region2: #{dqn_forward.5} parent=0 // pred_check
    _
  $region3: #{dqn_forward.5} parent=0 // pred_check_branch
    %9 = sbr.rel (0) target = $region5
  $region4: #{dqn_forward.5} parent=0 // pred_region
    _
  $region5: #{dqn_forward.5} parent=0 // pred_fallthru
    _
  // Predicated region
  $region6: #{dqn_forward.5} parent=0 // pred_check
    _
  $region7: #{dqn_forward.5} parent=0 // pred_check_branch
    %11 = sbr.rel (0) target = $region9
  $region8: #{dqn_forward.5} parent=0 // pred_region
    _
  $region9: #{dqn_forward.5} parent=0 // pred_fallthru
    _
  // Predicated region
  $region10: #{dqn_forward.5} parent=0 // pred_check
    _
  $region11: #{dqn_forward.5} parent=0 // pred_check_branch
    %13 = sbr.rel (0) target = $region13
  $region12: #{dqn_forward.5} parent=0 // pred_region
    _
  $region13: #{dqn_forward.5} parent=0 // pred_fallthru
    _
  %p15 = scmp.eq.s32.totalorder 0, 0
  // Predicated region
  $region14: #{dqn_forward.5} parent=0 // pred_check
    %p16 = pneg %p15
  $region15: #{dqn_forward.5} parent=0 // pred_check_branch
    %18 = sbr.rel (%p16) target = $region17
  $region16: #{dqn_forward.5} parent=0 // pred_region
    %19 = vst [vmem:[#allocation2] sm:$0xff] 0.0
    %20 = vst [vmem:[#allocation2 + $0x8] sm:$0xff] 0.0
    %21 = vst [vmem:[#allocation2 + $0x10] sm:$0xff] 0.0
    %22 = vst [vmem:[#allocation2 + $0x18] sm:$0xff] 0.0
  $region17: #{dqn_forward.5} parent=0 // pred_fallthru
    _
  %v23 = vld [vmem:[#allocation2] sm:$0xff]
  %v24 = vld [vmem:[#allocation2 + $0x8] sm:$0xff]
  %v25 = vld [vmem:[#allocation2 + $0x10] sm:$0xff]
  %v26 = vld [vmem:[#allocation2 + $0x18] sm:$0xff]
  %v27 = vld [vmem:[%s0] sm:$0xff]
  %v28 = vld [vmem:[%s0 + $0x8] sm:$0xff]
  %v29 = vld [vmem:[%s0 + $0x10] sm:$0xff]
  %v30 = vld [vmem:[%s0 + $0x18] sm:$0xff]
  %v31 = vld [vmem:[%s0 + $0x20] sm:$0xff]
  %v32 = vld [vmem:[%s0 + $0x28] sm:$0xff]
  %v33 = vld [vmem:[%s0 + $0x30] sm:$0xff]
  %v34 = vld [vmem:[%s0 + $0x38] sm:$0xff]
  %v35 = vld [vmem:[%s1] sm:$0xf]
  %v36 = vld [vmem:[%s1 + $0x4] sm:$0xf]
  %v37 = vld [vmem:[%s1 + $0x8] sm:$0xf]
  %v38 = vld [vmem:[%s1 + $0xc] sm:$0xf]
  %v39 = vld [vmem:[%s1 + $0x10] sm:$0xf]
  %v40 = vld [vmem:[%s1 + $0x14] sm:$0xf]
  %v41 = vld [vmem:[%s1 + $0x18] sm:$0xf]
  %v42 = vld [vmem:[%s1 + $0x1c] sm:$0xf]
  %v43 = vld [vmem:[%s1 + $0x20] sm:$0xf]
  %v44 = vld [vmem:[%s1 + $0x24] sm:$0xf]
  %v45 = vld [vmem:[%s1 + $0x28] sm:$0xf]
  %v46 = vld [vmem:[%s1 + $0x2c] sm:$0xf]
  %v47 = vld [vmem:[%s1 + $0x30] sm:$0xf]
  %v48 = vld [vmem:[%s1 + $0x34] sm:$0xf]
  %v49 = vld [vmem:[%s1 + $0x38] sm:$0xf]
  %v50 = vld [vmem:[%s1 + $0x3c] sm:$0xf]
  %v51 = vld [vmem:[%s1 + $0x40] sm:$0xf]
  %v52 = vld [vmem:[%s1 + $0x44] sm:$0xf]
  %v53 = vld [vmem:[%s1 + $0x48] sm:$0xf]
  %v54 = vld [vmem:[%s1 + $0x4c] sm:$0xf]
  %v55 = vld [vmem:[%s1 + $0x50] sm:$0xf]
  %v56 = vld [vmem:[%s1 + $0x54] sm:$0xf]
  %v57 = vld [vmem:[%s1 + $0x58] sm:$0xf]
  %v58 = vld [vmem:[%s1 + $0x5c] sm:$0xf]
  %v59 = vld [vmem:[%s1 + $0x60] sm:$0xf]
  %v60 = vld [vmem:[%s1 + $0x64] sm:$0xf]
  %v61 = vld [vmem:[%s1 + $0x68] sm:$0xf]
  %v62 = vld [vmem:[%s1 + $0x6c] sm:$0xf]
  %v63 = vld [vmem:[%s1 + $0x70] sm:$0xf]
  %v64 = vld [vmem:[%s1 + $0x74] sm:$0xf]
  %v65 = vld [vmem:[%s1 + $0x78] sm:$0xf]
  %v66 = vld [vmem:[%s1 + $0x7c] sm:$0xf]
  %v67 = vld [vmem:[%s1 + $0x80] sm:$0xf]
  %v68 = vld [vmem:[%s1 + $0x84] sm:$0xf]
  %v69 = vld [vmem:[%s1 + $0x88] sm:$0xf]
  %v70 = vld [vmem:[%s1 + $0x8c] sm:$0xf]
  %v71 = vld [vmem:[%s1 + $0x90] sm:$0xf]
  %v72 = vld [vmem:[%s1 + $0x94] sm:$0xf]
  %v73 = vld [vmem:[%s1 + $0x98] sm:$0xf]
  %v74 = vld [vmem:[%s1 + $0x9c] sm:$0xf]
  %v75 = vld [vmem:[%s1 + $0xa0] sm:$0xf]
  %v76 = vld [vmem:[%s1 + $0xa4] sm:$0xf]
  %v77 = vld [vmem:[%s1 + $0xa8] sm:$0xf]
  %v78 = vld [vmem:[%s1 + $0xac] sm:$0xf]
  %v79 = vld [vmem:[%s1 + $0xb0] sm:$0xf]
  %v80 = vld [vmem:[%s1 + $0xb4] sm:$0xf]
  %v81 = vld [vmem:[%s1 + $0xb8] sm:$0xf]
  %v82 = vld [vmem:[%s1 + $0xbc] sm:$0xf]
  %v83 = vld [vmem:[%s1 + $0xc0] sm:$0xf]
  %v84 = vld [vmem:[%s1 + $0xc4] sm:$0xf]
  %v85 = vld [vmem:[%s1 + $0xc8] sm:$0xf]
  %v86 = vld [vmem:[%s1 + $0xcc] sm:$0xf]
  %v87 = vld [vmem:[%s1 + $0xd0] sm:$0xf]
  %v88 = vld [vmem:[%s1 + $0xd4] sm:$0xf]
  %v89 = vld [vmem:[%s1 + $0xd8] sm:$0xf]
  %v90 = vld [vmem:[%s1 + $0xdc] sm:$0xf]
  %v91 = vld [vmem:[%s1 + $0xe0] sm:$0xf]
  %v92 = vld [vmem:[%s1 + $0xe4] sm:$0xf]
  %v93 = vld [vmem:[%s1 + $0xe8] sm:$0xf]
  %v94 = vld [vmem:[%s1 + $0xec] sm:$0xf]
  %v95 = vld [vmem:[%s1 + $0xf0] sm:$0xf]
  %v96 = vld [vmem:[%s1 + $0xf4] sm:$0xf]
  %v97 = vld [vmem:[%s1 + $0xf8] sm:$0xf]
  %v98 = vld [vmem:[%s1 + $0xfc] sm:$0xf]
  %v107 = vunpack.c.l.b16 %v27
  %v108 = vunpack.c.h.b16 %v27
  %v109 = vunpack.c.l.b16 %v28
  %v110 = vunpack.c.h.b16 %v28
  %v111 = vunpack.c.l.b16 %v29
  %v112 = vunpack.c.h.b16 %v29
  %v113 = vunpack.c.l.b16 %v30
  %v114 = vunpack.c.h.b16 %v30
  %v115 = vunpack.c.l.b16 %v31
  %v116 = vunpack.c.h.b16 %v31
  %v117 = vunpack.c.l.b16 %v32
  %v118 = vunpack.c.h.b16 %v32
  %v119 = vunpack.c.l.b16 %v33
  %v120 = vunpack.c.h.b16 %v33
  %v121 = vunpack.c.l.b16 %v34
  %v122 = vunpack.c.h.b16 %v34
  %v123 = vpack.c.b16 %v111, %v107
  %v124 = vpack.c.b16 %v112, %v108
  %v125 = vpack.c.b16 %v113, %v109
  %v126 = vpack.c.b16 %v114, %v110
  %v127 = vpack.c.b16 %v119, %v115
  %v128 = vpack.c.b16 %v120, %v116
  %v129 = vpack.c.b16 %v121, %v117
  %v130 = vpack.c.b16 %v122, %v118
  %v203 = vunpack.c.l.b16 %v35
  %v204 = vunpack.c.l.b16 %v36
  %v205 = vunpack.c.l.b16 %v37
  %v206 = vunpack.c.l.b16 %v38
  %v207 = vunpack.c.l.b16 %v39
  %v208 = vunpack.c.l.b16 %v40
  %v209 = vunpack.c.l.b16 %v41
  %v210 = vunpack.c.l.b16 %v42
  %v211 = vunpack.c.l.b16 %v43
  %v212 = vunpack.c.l.b16 %v44
  %v213 = vunpack.c.l.b16 %v45
  %v214 = vunpack.c.l.b16 %v46
  %v215 = vunpack.c.l.b16 %v47
  %v216 = vunpack.c.l.b16 %v48
  %v217 = vunpack.c.l.b16 %v49
  %v218 = vunpack.c.l.b16 %v50
  %v219 = vunpack.c.l.b16 %v51
  %v220 = vunpack.c.l.b16 %v52
  %v221 = vunpack.c.l.b16 %v53
  %v222 = vunpack.c.l.b16 %v54
  %v223 = vunpack.c.l.b16 %v55
  %v224 = vunpack.c.l.b16 %v56
  %v225 = vunpack.c.l.b16 %v57
  %v226 = vunpack.c.l.b16 %v58
  %v227 = vunpack.c.l.b16 %v59
  %v228 = vunpack.c.l.b16 %v60
  %v229 = vunpack.c.l.b16 %v61
  %v230 = vunpack.c.l.b16 %v62
  %v231 = vunpack.c.l.b16 %v63
  %v232 = vunpack.c.l.b16 %v64
  %v233 = vunpack.c.l.b16 %v65
  %v234 = vunpack.c.l.b16 %v66
  %v235 = vunpack.c.l.b16 %v67
  %v236 = vunpack.c.l.b16 %v68
  %v237 = vunpack.c.l.b16 %v69
  %v238 = vunpack.c.l.b16 %v70
  %v239 = vunpack.c.l.b16 %v71
  %v240 = vunpack.c.l.b16 %v72
  %v241 = vunpack.c.l.b16 %v73
  %v242 = vunpack.c.l.b16 %v74
  %v243 = vunpack.c.l.b16 %v75
  %v244 = vunpack.c.l.b16 %v76
  %v245 = vunpack.c.l.b16 %v77
  %v246 = vunpack.c.l.b16 %v78
  %v247 = vunpack.c.l.b16 %v79
  %v248 = vunpack.c.l.b16 %v80
  %v249 = vunpack.c.l.b16 %v81
  %v250 = vunpack.c.l.b16 %v82
  %v251 = vunpack.c.l.b16 %v83
  %v252 = vunpack.c.l.b16 %v84
  %v253 = vunpack.c.l.b16 %v85
  %v254 = vunpack.c.l.b16 %v86
  %v255 = vunpack.c.l.b16 %v87
  %v256 = vunpack.c.l.b16 %v88
  %v257 = vunpack.c.l.b16 %v89
  %v258 = vunpack.c.l.b16 %v90
  %v259 = vunpack.c.l.b16 %v91
  %v260 = vunpack.c.l.b16 %v92
  %v261 = vunpack.c.l.b16 %v93
  %v262 = vunpack.c.l.b16 %v94
  %v263 = vunpack.c.l.b16 %v95
  %v264 = vunpack.c.l.b16 %v96
  %v265 = vunpack.c.l.b16 %v97
  %v266 = vunpack.c.l.b16 %v98
  %v267 = vpack.c.b16 %v204, %v203
  %v268 = vpack.c.b16 %v206, %v205
  %v269 = vpack.c.b16 %v208, %v207
  %v270 = vpack.c.b16 %v210, %v209
  %v271 = vpack.c.b16 %v212, %v211
  %v272 = vpack.c.b16 %v214, %v213
  %v273 = vpack.c.b16 %v216, %v215
  %v274 = vpack.c.b16 %v218, %v217
  %v275 = vpack.c.b16 %v220, %v219
  %v276 = vpack.c.b16 %v222, %v221
  %v277 = vpack.c.b16 %v224, %v223
  %v278 = vpack.c.b16 %v226, %v225
  %v279 = vpack.c.b16 %v228, %v227
  %v280 = vpack.c.b16 %v230, %v229
  %v281 = vpack.c.b16 %v232, %v231
  %v282 = vpack.c.b16 %v234, %v233
  %v283 = vpack.c.b16 %v236, %v235
  %v284 = vpack.c.b16 %v238, %v237
  %v285 = vpack.c.b16 %v240, %v239
  %v286 = vpack.c.b16 %v242, %v241
  %v287 = vpack.c.b16 %v244, %v243
  %v288 = vpack.c.b16 %v246, %v245
  %v289 = vpack.c.b16 %v248, %v247
  %v290 = vpack.c.b16 %v250, %v249
  %v291 = vpack.c.b16 %v252, %v251
  %v292 = vpack.c.b16 %v254, %v253
  %v293 = vpack.c.b16 %v256, %v255
  %v294 = vpack.c.b16 %v258, %v257
  %v295 = vpack.c.b16 %v260, %v259
  %v296 = vpack.c.b16 %v262, %v261
  %v297 = vpack.c.b16 %v264, %v263
  %v298 = vpack.c.b16 %v266, %v265
  %331 = vmatprep.subr.bf16.mxu0 0
  %332 = vmatpush1.bf16.msra.mxu0 %v274
  %333 = vmatprep.subr.bf16.mxu0 0
  %334 = vmatpush1.bf16.msra.mxu0 %v273
  %335 = vmatprep.subr.bf16.mxu0 0
  %336 = vmatpush1.bf16.msra.mxu0 %v272
  %337 = vmatprep.subr.bf16.mxu0 0
  %338 = vmatpush1.bf16.msra.mxu0 %v271
  %339 = vmatprep.subr.bf16.mxu0 0
  %340 = vmatpush1.bf16.msra.mxu0 %v270
  %341 = vmatprep.subr.bf16.mxu0 0
  %342 = vmatpush1.bf16.msra.mxu0 %v269
  %343 = vmatprep.subr.bf16.mxu0 0
  %344 = vmatpush1.bf16.msra.mxu0 %v268
  %345 = vmatprep.subr.bf16.mxu0 0
  %346 = vmatpush1.bf16.msra.mxu0 %v267
  %347 = vmatprep.subr.bf16.mxu0 0
  %348 = vmatpush2.bf16.msra.mxu0 %v282
  %349 = vmatprep.subr.bf16.mxu0 0
  %350 = vmatpush2.bf16.msra.mxu0 %v281
  %351 = vmatprep.subr.bf16.mxu0 0
  %352 = vmatpush2.bf16.msra.mxu0 %v280
  %353 = vmatprep.subr.bf16.mxu0 0
  %354 = vmatpush2.bf16.msra.mxu0 %v279
  %355 = vmatprep.subr.bf16.mxu0 0
  %356 = vmatpush2.bf16.msra.mxu0 %v278
  %357 = vmatprep.subr.bf16.mxu0 0
  %358 = vmatpush2.bf16.msra.mxu0 %v277
  %359 = vmatprep.subr.bf16.mxu0 0
  %360 = vmatpush2.bf16.msra.mxu0 %v276
  %361 = vmatprep.subr.bf16.mxu0 0
  %362 = vmatpush2.bf16.msra.mxu0 %v275
  %363 = vmatprep.mubr.bf16.mxu0 %v124
  %364 = vmatmul.mubr.bf16.gmra.mxu0 %v123
  %v365 = vpop.f32.mrf.mxu0
  %v366 = vadd.f32 0.0, %v365
  %v367 = vpop.f32.mrf.mxu0
  %v368 = vpop.f32.mrf.mxu0
  %v369 = vadd.f32 0.0, %v368
  %v370 = vpop.f32.mrf.mxu0
  %371 = vmatprep.mubr.bf16.mxu0 %v128
  %372 = vmatmul.mubr.bf16.gmra.mxu0 %v127
  %v373 = vpop.f32.mrf.mxu0
  %v374 = vadd.f32 0.0, %v373
  %v375 = vpop.f32.mrf.mxu0
  %v376 = vpop.f32.mrf.mxu0
  %v377 = vadd.f32 0.0, %v376
  %v378 = vpop.f32.mrf.mxu0
  %379 = vdwg.mxu0
  %380 = vmatprep.subr.bf16.mxu0 0
  %381 = vmatpush1.bf16.msra.mxu0 %v290
  %382 = vmatprep.subr.bf16.mxu0 0
  %383 = vmatpush1.bf16.msra.mxu0 %v289
  %384 = vmatprep.subr.bf16.mxu0 0
  %385 = vmatpush1.bf16.msra.mxu0 %v288
  %386 = vmatprep.subr.bf16.mxu0 0
  %387 = vmatpush1.bf16.msra.mxu0 %v287
  %388 = vmatprep.subr.bf16.mxu0 0
  %389 = vmatpush1.bf16.msra.mxu0 %v286
  %390 = vmatprep.subr.bf16.mxu0 0
  %391 = vmatpush1.bf16.msra.mxu0 %v285
  %392 = vmatprep.subr.bf16.mxu0 0
  %393 = vmatpush1.bf16.msra.mxu0 %v284
  %394 = vmatprep.subr.bf16.mxu0 0
  %395 = vmatpush1.bf16.msra.mxu0 %v283
  %396 = vmatprep.subr.bf16.mxu0 0
  %397 = vmatpush2.bf16.msra.mxu0 %v298
  %398 = vmatprep.subr.bf16.mxu0 0
  %399 = vmatpush2.bf16.msra.mxu0 %v297
  %400 = vmatprep.subr.bf16.mxu0 0
  %401 = vmatpush2.bf16.msra.mxu0 %v296
  %402 = vmatprep.subr.bf16.mxu0 0
  %403 = vmatpush2.bf16.msra.mxu0 %v295
  %404 = vmatprep.subr.bf16.mxu0 0
  %405 = vmatpush2.bf16.msra.mxu0 %v294
  %406 = vmatprep.subr.bf16.mxu0 0
  %407 = vmatpush2.bf16.msra.mxu0 %v293
  %408 = vmatprep.subr.bf16.mxu0 0
  %409 = vmatpush2.bf16.msra.mxu0 %v292
  %410 = vmatprep.subr.bf16.mxu0 0
  %411 = vmatpush2.bf16.msra.mxu0 %v291
  %412 = vmatprep.mubr.bf16.mxu0 %v126
  %413 = vmatmul.mubr.bf16.gmra.mxu0 %v125
  %v414 = vpop.f32.mrf.mxu0
  %v415 = vadd.f32 %v366, %v414
  %v416 = vpop.f32.mrf.mxu0
  %v417 = vpop.f32.mrf.mxu0
  %v418 = vadd.f32 %v369, %v417
  %v419 = vpop.f32.mrf.mxu0
  %420 = vmatprep.mubr.bf16.mxu0 %v130
  %421 = vmatmul.mubr.bf16.gmra.mxu0 %v129
  %v422 = vpop.f32.mrf.mxu0
  %v423 = vadd.f32 %v374, %v422
  %v424 = vpop.f32.mrf.mxu0
  %v425 = vpop.f32.mrf.mxu0
  %v426 = vadd.f32 %v377, %v425
  %v427 = vpop.f32.mrf.mxu0
  %428 = vdwg.mxu0
  %v429 = vadd.f32 %v23, %v415
  %v430 = vadd.f32 %v24, %v418
  %v431 = vadd.f32 %v25, %v423
  %v432 = vadd.f32 %v26, %v426
  %433 = vst [vmem:[#allocation2] sm:$0xff] %v429
  %434 = vst [vmem:[#allocation2 + $0x8] sm:$0xff] %v430
  %435 = vst [vmem:[#allocation2 + $0x10] sm:$0xff] %v431
  %436 = vst [vmem:[#allocation2 + $0x18] sm:$0xff] %v432
  // Predicated region
  $region18: #{dqn_forward.5} parent=0 // pred_check
    %p437 = pneg %p15
  $region19: #{dqn_forward.5} parent=0 // pred_check_branch
    %439 = sbr.rel (%p437) target = $region21
  $region20: #{dqn_forward.5} parent=0 // pred_region
    %v440 = vld [vmem:[#allocation2] sm:$0xff]
    %v441 = vld [vmem:[#allocation2 + $0x8] sm:$0xff]
    %v442 = vld [vmem:[#allocation2 + $0x10] sm:$0xff]
    %v443 = vld [vmem:[#allocation2 + $0x18] sm:$0xff]
    %v444 = vld [vmem:[%s2] sm:$0x1]
    %v446 = vlaneseq
    %v447 = vshrl.u32 %v446, 7
    %v448 = vsub.s32 0, %v447
    %v449 = vrot.slane %v444, %v448
    %v451 = vadd.f32 %v440, %v449
    %v452 = vadd.f32 %v441, %v449
    %v453 = vadd.f32 %v442, %v449
    %v454 = vadd.f32 %v443, %v449
    %v455 = vmax.f32 %v451, 0.0
    %v456 = vmax.f32 %v452, 0.0
    %v457 = vmax.f32 %v453, 0.0
    %v458 = vmax.f32 %v454, 0.0
    %459 = vst [vmem:[%s3] sm:$0xff] %v455
    %460 = vst [vmem:[%s3 + $0x8] sm:$0xff] %v456
    %461 = vst [vmem:[%s3 + $0x10] sm:$0xff] %v457
    %462 = vst [vmem:[%s3 + $0x18] sm:$0xff] %v458
  $region21: #{dqn_forward.5} parent=0 // pred_fallthru
    _
  // Predicated region
  $region22: #{dqn_forward.5} parent=0 // pred_check
    _
  $region23: #{dqn_forward.5} parent=0 // pred_check_branch
    %464 = sbr.rel (0) target = $region25
  $region24: #{dqn_forward.5} parent=0 // pred_region
    _
  $region25: #{dqn_forward.5} parent=0 // pred_fallthru
    _
  // Predicated region
  $region26: #{dqn_forward.5} parent=0 // pred_check
    _
  $region27: #{dqn_forward.5} parent=0 // pred_check_branch
    %466 = sbr.rel (0) target = $region29
  $region28: #{dqn_forward.5} parent=0 // pred_region
    _
  $region29: #{dqn_forward.5} parent=0 // pred_fallthru
    _

// kernel: dqn_forward.6
$region0: #{dqn_forward.6}
  #allocation0 [shape = 'u32[]', space=smem, size = 0x4, offset = 0x4, fixed_abs, tag = 'smem constant byte address 0x4 - core index']
  #allocation1 [shape = 'u32[144,128]{1,0:T(1,128)}', space=vmem, size = 0x12000, scoped, tag = 'internal scratch']
  #allocation2 [shape = 'f32[16,128]{1,0:T(8,128)}', space=vmem, size = 0x2000, scoped, tag = 'scratch operand']
  %s0 = inlined_call_operand.vmem [shape: bf16[16,640], index: 0, kind: input, shape index: {}]
  %s1 = inlined_call_operand.vmem [shape: bf16[640,128], index: 1, kind: input, shape index: {}]
  %s2 = inlined_call_operand.vmem [shape: f32[1,128], index: 2, kind: input, shape index: {}]
  %s3 = inlined_call_operand.vmem [shape: f32[16,128], index: 3, kind: output, shape index: {}]
  %s4 = sld [smem:[#allocation0]]
  $region94: #{dqn_forward.6} parent=0
    _
  %s6 = ssub.s32 1, %s4
  %s7 = scalar_select 0, %s6, %s4
  $region1: #{dqn_forward.6} parent=0
    #allocation3 [shape = 'u8[8192]{0}', space=vmem, size = 0x2000, scoped, tag = 'input window, operand 0']
    loop: start=0, step=1, limit=7
    $region2: #{dqn_forward.6} parent=1 // loop_pre_header
      _
    $region3: #{dqn_forward.6} parent=1 // loop_header
      %s9 = sphi 0, %s13
      %p10 = scmp.ge.s32.totalorder %s9, 7
      %s16 = sphi 0, %s35
      %s17 = sphi 0, %s31
      %s18 = sphi 0, %s27
      %s19 = sphi 0, %s16
      %s20 = sphi 0, %s17
      %s21 = sphi 0, %s18
      %s22 = sphi 0, %s19
      %s23 = sphi 0, %s20
      %s24 = sphi 0, %s21
      %s40 = sphi 0, %s42
      %s43 = sphi 0, %s40
      %s44 = sphi 0, %s43
      %s60 = sphi 0, %s44
      %s68 = sphi 0, %s70
      %s71 = sphi 0, %s68
      %s72 = sphi 0, %s71
      %s88 = sphi 0, %s72
      %s94 = sphi 0, %s96
      %s97 = sphi 0, %s94
      %s98 = sphi 0, %s97
      %s114 = sphi 0, %s98
      %s122 = sphi 0, %s124
      %s125 = sphi 0, %s122
      %s126 = sphi 0, %s125
      %s142 = sphi 0, %s126
    $region4: #{dqn_forward.6} parent=1 // loop_header_branch
      %12 = sbr.rel (%p10) target = $region8
    $region5: #{dqn_forward.6} parent=1 // loop_body
      %s14 = ssub.s32 %s9, 1
      %s15 = ssub.s32 %s9, 2
      %s25 = sadd.s32 1, %s18
      %p26 = scmp.ge.s32.totalorder %s25, 5
      %s27 = scalar_select %p26, 0, %s25
      %s28 = sadd.s32 1, %s17
      %s29 = scalar_select %p26, %s28, %s17
      %p30 = scmp.ge.s32.totalorder %s29, 1
      %s31 = scalar_select %p30, 0, %s29
      %s32 = sadd.s32 1, %s16
      %s33 = scalar_select %p30, %s32, %s16
      %p34 = scmp.ge.s32.totalorder %s33, 1
      %s35 = scalar_select %p34, 0, %s33
      %s36 = ssub.s32 %s16, %s35
      %s37 = ssub.s32 %s18, %s27
      %s38 = sor.u32 %s36, %s37
      %p39 = scmp.eq.s32.totalorder %s38, 0
      %s41 = sadd.s32 %s40, 1
      %s42 = scalar_select %p39, %s40, %s41
      %p45 = pneg %p39
      %p46 = scmp.eq.s32.totalorder %s9, 4
      %p47 = por %p45, %p46
      %p48 = scmp.ne.s32.totalorder %s40, %s43
      %p49 = scmp.eq.s32.totalorder %s9, 0
      %p50 = por %p48, %p49
      %p51 = scmp.ne.s32.totalorder %s40, %s43
      %p52 = scmp.eq.s32.totalorder %s14, 4
      %p53 = por %p51, %p52
      %p54 = scmp.ne.s32.totalorder %s43, %s44
      %p55 = scmp.eq.s32.totalorder %s14, 0
      %p56 = por %p54, %p55
      %p57 = scmp.ne.s32.totalorder %s43, %s44
      %p58 = scmp.eq.s32.totalorder %s15, 4
      %p59 = por %p57, %p58
      %p61 = scmp.ne.s32.totalorder %s44, %s60
      %p62 = scmp.eq.s32.totalorder %s15, 0
      %p63 = por %p61, %p62
      %s64 = ssub.s32 %s18, %s27
      %s65 = ssub.s32 %s17, %s31
      %s66 = sor.u32 %s64, %s65
      %p67 = scmp.eq.s32.totalorder %s66, 0
      %s69 = sadd.s32 %s68, 1
      %s70 = scalar_select %p67, %s68, %s69
      %p73 = pneg %p67
      %p74 = scmp.eq.s32.totalorder %s9, 4
      %p75 = por %p73, %p74
      %p76 = scmp.ne.s32.totalorder %s68, %s71
      %p77 = scmp.eq.s32.totalorder %s9, 0
      %p78 = por %p76, %p77
      %p79 = scmp.ne.s32.totalorder %s68, %s71
      %p80 = scmp.eq.s32.totalorder %s14, 4
      %p81 = por %p79, %p80
      %p82 = scmp.ne.s32.totalorder %s71, %s72
      %p83 = scmp.eq.s32.totalorder %s14, 0
      %p84 = por %p82, %p83
      %p85 = scmp.ne.s32.totalorder %s71, %s72
      %p86 = scmp.eq.s32.totalorder %s15, 4
      %p87 = por %p85, %p86
      %p89 = scmp.ne.s32.totalorder %s72, %s88
      %p90 = scmp.eq.s32.totalorder %s15, 0
      %p91 = por %p89, %p90
      %s92 = ssub.s32 %s17, %s31
      %p93 = scmp.eq.s32.totalorder %s92, 0
      %s95 = sadd.s32 %s94, 1
      %s96 = scalar_select %p93, %s94, %s95
      %p99 = pneg %p93
      %p100 = scmp.eq.s32.totalorder %s9, 4
      %p101 = por %p99, %p100
      %p102 = scmp.ne.s32.totalorder %s94, %s97
      %p103 = scmp.eq.s32.totalorder %s9, 0
      %p104 = por %p102, %p103
      %p105 = scmp.ne.s32.totalorder %s94, %s97
      %p106 = scmp.eq.s32.totalorder %s14, 4
      %p107 = por %p105, %p106
      %p108 = scmp.ne.s32.totalorder %s97, %s98
      %p109 = scmp.eq.s32.totalorder %s14, 0
      %p110 = por %p108, %p109
      %p111 = scmp.ne.s32.totalorder %s97, %s98
      %p112 = scmp.eq.s32.totalorder %s15, 4
      %p113 = por %p111, %p112
      %p115 = scmp.ne.s32.totalorder %s98, %s114
      %p116 = scmp.eq.s32.totalorder %s15, 0
      %p117 = por %p115, %p116
      %s118 = ssub.s32 %s16, %s35
      %s119 = ssub.s32 %s17, %s31
      %s120 = sor.u32 %s118, %s119
      %p121 = scmp.eq.s32.totalorder %s120, 0
      %s123 = sadd.s32 %s122, 1
      %s124 = scalar_select %p121, %s122, %s123
      %p127 = pneg %p121
      %p128 = scmp.eq.s32.totalorder %s9, 4
      %p129 = por %p127, %p128
      %p130 = scmp.ne.s32.totalorder %s122, %s125
      %p131 = scmp.eq.s32.totalorder %s9, 0
      %p132 = por %p130, %p131
      %p133 = scmp.ne.s32.totalorder %s122, %s125
      %p134 = scmp.eq.s32.totalorder %s14, 4
      %p135 = por %p133, %p134
      %p136 = scmp.ne.s32.totalorder %s125, %s126
      %p137 = scmp.eq.s32.totalorder %s14, 0
      %p138 = por %p136, %p137
      %p139 = scmp.ne.s32.totalorder %s125, %s126
      %p140 = scmp.eq.s32.totalorder %s15, 4
      %p141 = por %p139, %p140
      %p143 = scmp.ne.s32.totalorder %s126, %s142
      %p144 = scmp.eq.s32.totalorder %s15, 0
      %p145 = por %p143, %p144
      %p146 = scmp.le.s32.totalorder 1, %s9
      %p147 = scmp.lt.s32.totalorder %s9, 6
      %p148 = pnand %p146, %p147
      %p149 = pneg %p148
      // Predicated region
      $region9: #{dqn_forward.6} parent=5 // pred_check
        _
      $region10: #{dqn_forward.6} parent=5 // pred_check_branch
        %151 = sbr.rel (%p148) target = $region12
      $region11: #{dqn_forward.6} parent=5 // pred_region
        %s152 = ssub.s32 %s9, 1
        // Predicated region
        $region13: #{dqn_forward.6} parent=11 // pred_check
          %p153 = pneg %p110
        $region14: #{dqn_forward.6} parent=11 // pred_check_branch
          %155 = sbr.rel (%p153) target = $region16
        $region15: #{dqn_forward.6} parent=11 // pred_region
          %p156 = scmp.lt.s32.totalorder %s20, 0
          %s157 = scalar_select %p156, %s20, 0
          %s158 = scalar_lea.vmem %s2, %s157
        $region16: #{dqn_forward.6} parent=11 // pred_fallthru
          _
      $region12: #{dqn_forward.6} parent=5 // pred_fallthru
        _
      %p159 = scmp.lt.s32.totalorder %s9, 5
      // Predicated region
      $region17: #{dqn_forward.6} parent=5 // pred_check
        %p160 = pneg %p159
      $region18: #{dqn_forward.6} parent=5 // pred_check_branch
        %162 = sbr.rel (%p160) target = $region20
      $region19: #{dqn_forward.6} parent=5 // pred_region
        // Predicated region
        $region21: #{dqn_forward.6} parent=19 // pred_check
          %p163 = pneg %p50
        $region22: #{dqn_forward.6} parent=19 // pred_check_branch
          %165 = sbr.rel (%p163) target = $region24
        $region23: #{dqn_forward.6} parent=19 // pred_region
          %s166 = sand.u32 %s40, 1
          %s167 = sand.u32 %s40, 1
          %s168 = smul.addr %s167, 8
          %s169 = scalar_lea.vmem [#allocation3], %s168
          %s170 = smul.u32 2, %s16
          %s171 = smul.addr %s170, 5
          %s172 = sadd.s32 %s18, %s171
          %s173 = smul.addr %s172, 4
          %s174 = scalar_lea.vmem %s0, %s173
          // Predicated region
          $region25: #{dqn_forward.6} parent=23 // pred_check
            _
          $region26: #{dqn_forward.6} parent=23 // pred_check_branch
            %176 = sbr.rel (0) target = $region28
          $region27: #{dqn_forward.6} parent=23 // pred_region
            // Predicated region
            $region29: #{dqn_forward.6} parent=27 // pred_check
              _
            $region30: #{dqn_forward.6} parent=27 // pred_check_branch
              %178 = sbr.rel target = $region32
            $region31: #{dqn_forward.6} parent=27 // pred_region
              // Predicated region
              $region44: #{dqn_forward.6} parent=31 // pred_check
                _
              $region45: #{dqn_forward.6} parent=31 // pred_check_branch
                %196 = sbr.rel (0) target = $region47
              $region46: #{dqn_forward.6} parent=31 // pred_region
                loop: start=0, step=1, limit=1
                $region48: #{dqn_forward.6} parent=46 // loop_pre_header
                  _
                $region49: #{dqn_forward.6} parent=46 // loop_header
                  %s198 = sphi 0, %s202
                  %p199 = scmp.ge.s32.totalorder %s198, 1
                  %s203 = sphi %s174, %s174
                  %s204 = sphi %s169, %s169
                $region50: #{dqn_forward.6} parent=46 // loop_header_branch
                  %201 = sbr.rel (%p199) target = $region54
                $region51: #{dqn_forward.6} parent=46 // loop_body
                  _
                $region52: #{dqn_forward.6} parent=46 // loop_footer
                  %s202 = sadd.s32 1, %s198
                $region53: #{dqn_forward.6} parent=46 // loop_footer_branch
                  %197 = sbr.rel target = $region49
                $region54: #{dqn_forward.6} parent=46 // loop_exit
                  _
                %s206 = ssub.s32 16, 1
                loop: start=0, step=1, limit=1
                $region55: #{dqn_forward.6} parent=46 // loop_pre_header
                  _
                $region56: #{dqn_forward.6} parent=46 // loop_header
                  %s208 = sphi 0, %s212
                  %p209 = scmp.ge.s32.totalorder %s208, 1
                  %s213 = sphi %s174, %s174
                  %s214 = sphi %s169, %s169
                $region57: #{dqn_forward.6} parent=46 // loop_header_branch
                  %211 = sbr.rel (%p209) target = $region61
                $region58: #{dqn_forward.6} parent=46 // loop_body
                  %v215 = vld [vmem:[%s213] sm:%s206]
                  %216 = vst [vmem:[%s214] sm:%s206] %v215
                  %v217 = vld [vmem:[%s213 + $0x14] sm:%s206]
                  %218 = vst [vmem:[%s214 + $0x4] sm:%s206] %v217
                $region59: #{dqn_forward.6} parent=46 // loop_footer
                  %s212 = sadd.s32 1, %s208
                $region60: #{dqn_forward.6} parent=46 // loop_footer_branch
                  %207 = sbr.rel target = $region56
                $region61: #{dqn_forward.6} parent=46 // loop_exit
                  _
              $region47: #{dqn_forward.6} parent=31 // pred_fallthru
                _
            $region32: #{dqn_forward.6} parent=27 // pred_fallthru
              _
            // Predicated region
            $region33: #{dqn_forward.6} parent=27 // pred_check
              _
            $region34: #{dqn_forward.6} parent=27 // pred_check_branch
              %180 = sbr.rel (0) target = $region36
            $region35: #{dqn_forward.6} parent=27 // pred_region
              %s182 = ssub.s32 16, 1
              loop: start=0, step=1, limit=1
              $region37: #{dqn_forward.6} parent=35 // loop_pre_header
                _
              $region38: #{dqn_forward.6} parent=35 // loop_header
                %s184 = sphi 0, %s188
                %p185 = scmp.ge.s32.totalorder %s184, 1
                %s189 = sphi %s174, %s174
                %s190 = sphi %s169, %s169
              $region39: #{dqn_forward.6} parent=35 // loop_header_branch
                %187 = sbr.rel (%p185) target = $region43
              $region40: #{dqn_forward.6} parent=35 // loop_body
                %v191 = vld [vmem:[%s189] sm:%s182]
                %192 = vst [vmem:[%s190] sm:%s182] %v191
                %v193 = vld [vmem:[%s189 + $0x14] sm:%s182]
                %194 = vst [vmem:[%s190 + $0x4] sm:%s182] %v193
              $region41: #{dqn_forward.6} parent=35 // loop_footer
                %s188 = sadd.s32 1, %s184
              $region42: #{dqn_forward.6} parent=35 // loop_footer_branch
                %183 = sbr.rel target = $region38
              $region43: #{dqn_forward.6} parent=35 // loop_exit
                _
            $region36: #{dqn_forward.6} parent=27 // pred_fallthru
              _
          $region28: #{dqn_forward.6} parent=23 // pred_fallthru
            _
          %219 = vnop
        $region24: #{dqn_forward.6} parent=19 // pred_fallthru
          _
        // Predicated region
        $region62: #{dqn_forward.6} parent=19 // pred_check
          %p220 = pneg %p78
        $region63: #{dqn_forward.6} parent=19 // pred_check_branch
          %222 = sbr.rel (%p220) target = $region65
        $region64: #{dqn_forward.6} parent=19 // pred_region
          %s223 = smul.u32 16, %s18
          %p224 = scmp.lt.s32.totalorder %s223, 79
          %s225 = scalar_select %p224, %s223, 79
          %p226 = scmp.lt.s32.totalorder %s17, 0
          %s227 = scalar_select %p226, %s17, 0
          %s228 = sadd.s32 %s227, %s225
          %s229 = smul.addr %s228, 4
          %s230 = scalar_lea.vmem %s1, %s229
          %s231 = smul.u32 16, %s18
        $region65: #{dqn_forward.6} parent=19 // pred_fallthru
          _
      $region20: #{dqn_forward.6} parent=5 // pred_fallthru
        _
      %p232 = scmp.le.s32.totalorder 1, %s9
      %p233 = scmp.lt.s32.totalorder %s9, 6
      %p234 = pnand %p232, %p233
      %p235 = pneg %p234
      // Predicated region
      $region66: #{dqn_forward.6} parent=5 // pred_check
        _
      $region67: #{dqn_forward.6} parent=5 // pred_check_branch
        %237 = sbr.rel (%p234) target = $region69
      $region68: #{dqn_forward.6} parent=5 // pred_region
        %s238 = ssub.s32 %s9, 1
        %s239 = sand.u32 %s43, 1
        %s240 = sand.u32 %s43, 1
        %s241 = smul.addr %s240, 8
        %s242 = scalar_lea.vmem [#allocation3], %s241
        // Predicated region
        $region70: #{dqn_forward.6} parent=68 // pred_check
          %p243 = pneg %p56
        $region71: #{dqn_forward.6} parent=68 // pred_check_branch
          %245 = sbr.rel (%p243) target = $region73
        $region72: #{dqn_forward.6} parent=68 // pred_region
          _
        $region73: #{dqn_forward.6} parent=68 // pred_fallthru
          _
        %s246 = sand.u32 %s43, 1
        %s247 = sand.u32 %s43, 1
        %s248 = smul.addr %s247, 8
        %s249 = scalar_lea.vmem [#allocation3], %s248
        %p250 = pneg %p56
        %p251 = pneg %p53
        %s252 = smul.u32 16, %s21
        %p253 = scmp.lt.s32.totalorder %s252, 79
        %s254 = scalar_select %p253, %s252, 79
        %p255 = scmp.lt.s32.totalorder %s20, 0
        %s256 = scalar_select %p255, %s20, 0
        %s257 = sadd.s32 %s256, %s254
        %s258 = smul.addr %s257, 4
        %s259 = scalar_lea.vmem %s1, %s258
        %p260 = pneg %p84
        %p261 = pneg %p81
        %p262 = scmp.lt.s32.totalorder %s20, 0
        %s263 = scalar_select %p262, %s20, 0
        %s264 = scalar_lea.vmem %s2, %s263
        %p265 = pneg %p110
        %p266 = pneg %p107
        %p267 = pneg %p138
        %p268 = pneg %p135
        %s269 = smul.u32 2, %s19
        %p270 = scmp.lt.s32.totalorder %s269, 1
        %s271 = scalar_select %p270, %s269, 1
        %p272 = scmp.lt.s32.totalorder %s20, 0
        %s273 = scalar_select %p272, %s20, 0
        %s274 = sadd.s32 %s273, %s271
        %s275 = smul.addr %s274, 8
        %s276 = scalar_lea.vmem %s3, %s275
        %s277 = smul.u32 2, %s19
        %s278 = smul.u32 16, %s21
        %p279 = scmp.lt.s32.totalorder %s278, 79
        %s280 = scalar_select %p279, %s278, 79
        %p281 = scmp.lt.s32.totalorder %s20, 0
        %s282 = scalar_select %p281, %s20, 0
        %s283 = sadd.s32 %s282, %s280
        %s284 = smul.addr %s283, 4
        %s285 = scalar_lea.vmem %s1, %s284
        %s286 = smul.u32 16, %s21
        %p287 = scmp.lt.s32.totalorder %s20, 0
        %s288 = scalar_select %p287, %s20, 0
        %s289 = scalar_lea.vmem %s2, %s288
        %s290 = smul.u32 2, %s19
        %p291 = scmp.lt.s32.totalorder %s290, 1
        %s292 = scalar_select %p291, %s290, 1
        %p293 = scmp.lt.s32.totalorder %s20, 0
        %s294 = scalar_select %p293, %s20, 0
        %s295 = sadd.s32 %s294, %s292
        %s296 = smul.addr %s295, 8
        %s297 = scalar_lea.vmem %s3, %s296
        %s298 = smul.u32 2, %s19
        %p300 = scmp.eq.s32.totalorder %s21, 0
        // Predicated region
        $region74: #{dqn_forward.6} parent=68 // pred_check
          %p301 = pneg %p300
        $region75: #{dqn_forward.6} parent=68 // pred_check_branch
          %303 = sbr.rel (%p301) target = $region77
        $region76: #{dqn_forward.6} parent=68 // pred_region
          %304 = vst [vmem:[#allocation2] sm:$0xff] 0.0
          %305 = vst [vmem:[#allocation2 + $0x8] sm:$0xff] 0.0
        $region77: #{dqn_forward.6} parent=68 // pred_fallthru
          _
        %v306 = vld [vmem:[#allocation2] sm:$0xff]
        %v307 = vld [vmem:[#allocation2 + $0x8] sm:$0xff]
        %v308 = vld [vmem:[%s242] sm:$0xf]
        %v309 = vld [vmem:[%s242 + $0x4] sm:$0xf]
        %v310 = vld [vmem:[%s285] sm:$0xf]
        %v311 = vld [vmem:[%s285 + $0x4] sm:$0xf]
        %v312 = vld [vmem:[%s285 + $0x8] sm:$0xf]
        %v313 = vld [vmem:[%s285 + $0xc] sm:$0xf]
        %v314 = vld [vmem:[%s285 + $0x10] sm:$0xf]
        %v315 = vld [vmem:[%s285 + $0x14] sm:$0xf]
        %v316 = vld [vmem:[%s285 + $0x18] sm:$0xf]
        %v317 = vld [vmem:[%s285 + $0x1c] sm:$0xf]
        %v318 = vld [vmem:[%s285 + $0x20] sm:$0xf]
        %v319 = vld [vmem:[%s285 + $0x24] sm:$0xf]
        %v320 = vld [vmem:[%s285 + $0x28] sm:$0xf]
        %v321 = vld [vmem:[%s285 + $0x2c] sm:$0xf]
        %v322 = vld [vmem:[%s285 + $0x30] sm:$0xf]
        %v323 = vld [vmem:[%s285 + $0x34] sm:$0xf]
        %v324 = vld [vmem:[%s285 + $0x38] sm:$0xf]
        %v325 = vld [vmem:[%s285 + $0x3c] sm:$0xf]
        %v328 = vunpack.c.l.b16 %v308
        %v329 = vunpack.c.l.b16 %v309
        %v330 = vpack.c.b16 %v329, %v328
        %v348 = vunpack.c.l.b16 %v310
        %v349 = vunpack.c.l.b16 %v311
        %v350 = vunpack.c.l.b16 %v312
        %v351 = vunpack.c.l.b16 %v313
        %v352 = vunpack.c.l.b16 %v314
        %v353 = vunpack.c.l.b16 %v315
        %v354 = vunpack.c.l.b16 %v316
        %v355 = vunpack.c.l.b16 %v317
        %v356 = vunpack.c.l.b16 %v318
        %v357 = vunpack.c.l.b16 %v319
        %v358 = vunpack.c.l.b16 %v320
        %v359 = vunpack.c.l.b16 %v321
        %v360 = vunpack.c.l.b16 %v322
        %v361 = vunpack.c.l.b16 %v323
        %v362 = vunpack.c.l.b16 %v324
        %v363 = vunpack.c.l.b16 %v325
        %v364 = vpack.c.b16 %v349, %v348
        %v365 = vpack.c.b16 %v351, %v350
        %v366 = vpack.c.b16 %v353, %v352
        %v367 = vpack.c.b16 %v355, %v354
        %v368 = vpack.c.b16 %v357, %v356
        %v369 = vpack.c.b16 %v359, %v358
        %v370 = vpack.c.b16 %v361, %v360
        %v371 = vpack.c.b16 %v363, %v362
        %380 = vmatprep.subr.bf16.mxu0 0
        %381 = vmatpush1.bf16.msra.mxu0 %v371
        %382 = vmatprep.subr.bf16.mxu0 0
        %383 = vmatpush1.bf16.msra.mxu0 %v370
        %384 = vmatprep.subr.bf16.mxu0 0
        %385 = vmatpush1.bf16.msra.mxu0 %v369
        %386 = vmatprep.subr.bf16.mxu0 0
        %387 = vmatpush1.bf16.msra.mxu0 %v368
        %388 = vmatprep.subr.bf16.mxu0 0
        %389 = vmatpush1.bf16.msra.mxu0 %v367
        %390 = vmatprep.subr.bf16.mxu0 0
        %391 = vmatpush1.bf16.msra.mxu0 %v366
        %392 = vmatprep.subr.bf16.mxu0 0
        %393 = vmatpush1.bf16.msra.mxu0 %v365
        %394 = vmatprep.subr.bf16.mxu0 0
        %395 = vmatpush1.bf16.msra.mxu0 %v364
        %396 = vmatprep.subr.bf16.mxu0 0
        %397 = vmatpush2.bf16.msra.mxu0 0
        %398 = vmatprep.subr.bf16.mxu0 0
        %399 = vmatpush2.bf16.msra.mxu0 0
        %400 = vmatprep.subr.bf16.mxu0 0
        %401 = vmatpush2.bf16.msra.mxu0 0
        %402 = vmatprep.subr.bf16.mxu0 0
        %403 = vmatpush2.bf16.msra.mxu0 0
        %404 = vmatprep.subr.bf16.mxu0 0
        %405 = vmatpush2.bf16.msra.mxu0 0
        %406 = vmatprep.subr.bf16.mxu0 0
        %407 = vmatpush2.bf16.msra.mxu0 0
        %408 = vmatprep.subr.bf16.mxu0 0
        %409 = vmatpush2.bf16.msra.mxu0 0
        %410 = vmatprep.subr.bf16.mxu0 0
        %411 = vmatpush2.bf16.msra.mxu0 0
        %412 = vmatprep.mubr.bf16.mxu0 0
        %413 = vmatmul.mubr.bf16.gmra.mxu0 %v330
        %v414 = vpop.f32.mrf.mxu0
        %v415 = vadd.f32 0.0, %v414
        %v416 = vpop.f32.mrf.mxu0
        %v417 = vpop.f32.mrf.mxu0
        %v418 = vadd.f32 0.0, %v417
        %v419 = vpop.f32.mrf.mxu0
        %420 = vdwg.mxu0
        %v421 = vadd.f32 %v306, %v415
        %v422 = vadd.f32 %v307, %v418
        %423 = vst [vmem:[#allocation2] sm:$0xff] %v421
        %424 = vst [vmem:[#allocation2 + $0x8] sm:$0xff] %v422
        %p425 = scmp.eq.s32.totalorder %s21, 4
        // Predicated region
        $region78: #{dqn_forward.6} parent=68 // pred_check
          %p426 = pneg %p425
        $region79: #{dqn_forward.6} parent=68 // pred_check_branch
          %428 = sbr.rel (%p426) target = $region81
        $region80: #{dqn_forward.6} parent=68 // pred_region
          %v429 = vld [vmem:[#allocation2] sm:$0xff]
          %v430 = vld [vmem:[#allocation2 + $0x8] sm:$0xff]
          %v431 = vld [vmem:[%s289] sm:$0x1]
          %v433 = vlaneseq
          %v434 = vshrl.u32 %v433, 7
          %v435 = vsub.s32 0, %v434
          %v436 = vrot.slane %v431, %v435
          %v438 = vadd.f32 %v429, %v436
          %v439 = vadd.f32 %v430, %v436
          %v440 = vmax.f32 %v438, 0.0
          %v441 = vmax.f32 %v439, 0.0
          %442 = vst [vmem:[%s297] sm:$0xff] %v440
          %443 = vst [vmem:[%s297 + $0x8] sm:$0xff] %v441
        $region81: #{dqn_forward.6} parent=68 // pred_fallthru
          _
        %s444 = smul.u32 2, %s19
        %p445 = scmp.lt.s32.totalorder %s444, 1
        %s446 = scalar_select %p445, %s444, 1
        %p447 = scmp.lt.s32.totalorder %s20, 0
        %s448 = scalar_select %p447, %s20, 0
        %s449 = sadd.s32 %s448, %s446
        %s450 = smul.addr %s449, 8
        %s451 = scalar_lea.vmem %s3, %s450
        // Predicated region
        $region82: #{dqn_forward.6} parent=68 // pred_check
          %p452 = pneg %p135
        $region83: #{dqn_forward.6} parent=68 // pred_check_branch
          %454 = sbr.rel (%p452) target = $region85
        $region84: #{dqn_forward.6} parent=68 // pred_region
          %s455 = smul.u32 2, %s19
        $region85: #{dqn_forward.6} parent=68 // pred_fallthru
          _
        // Predicated region
        $region86: #{dqn_forward.6} parent=68 // pred_check
          %p456 = pneg %p135
        $region87: #{dqn_forward.6} parent=68 // pred_check_branch
          %458 = sbr.rel (%p456) target = $region89
        $region88: #{dqn_forward.6} parent=68 // pred_region
          %s459 = smul.u32 2, %s19
          %p460 = scmp.lt.s32.totalorder %s459, 1
          %s461 = scalar_select %p460, %s459, 1
          %p462 = scmp.lt.s32.totalorder %s20, 0
          %s463 = scalar_select %p462, %s20, 0
          %s464 = sadd.s32 %s463, %s461
          %s465 = smul.addr %s464, 8
          %s466 = scalar_lea.vmem %s3, %s465
        $region89: #{dqn_forward.6} parent=68 // pred_fallthru
          _
      $region69: #{dqn_forward.6} parent=5 // pred_fallthru
        _
      %p467 = scmp.le.s32.totalorder 2, %s9
      // Predicated region
      $region90: #{dqn_forward.6} parent=5 // pred_check
        %p468 = pneg %p467
      $region91: #{dqn_forward.6} parent=5 // pred_check_branch
        %470 = sbr.rel (%p468) target = $region93
      $region92: #{dqn_forward.6} parent=5 // pred_region
        %s471 = ssub.s32 %s9, 2
      $region93: #{dqn_forward.6} parent=5 // pred_fallthru
        _
    $region6: #{dqn_forward.6} parent=1 // loop_footer
      %s13 = sadd.s32 1, %s9
    $region7: #{dqn_forward.6} parent=1 // loop_footer_branch
      %8 = sbr.rel target = $region3
    $region8: #{dqn_forward.6} parent=1 // loop_exit
      _

// kernel: dqn_forward.7
$region0: #{dqn_forward.7}
  #allocation0 [shape = 'u32[]', space=smem, size = 0x4, offset = 0x4, fixed_abs, tag = 'smem constant byte address 0x4 - core index']
  #allocation1 [shape = 'u32[144,128]{1,0:T(1,128)}', space=vmem, size = 0x12000, scoped, tag = 'internal scratch']
  #allocation2 [shape = 'f32[16,512]{1,0:T(8,128)}', space=vmem, size = 0x8000, scoped, tag = 'scratch operand']
  %s0 = inlined_call_operand.vmem [shape: bf16[16,128], index: 0, kind: input, shape index: {}]
  %s1 = inlined_call_operand.vmem [shape: bf16[128,512], index: 1, kind: input, shape index: {}]
  %s2 = inlined_call_operand.vmem [shape: f32[1,512], index: 2, kind: input, shape index: {}]
  %s3 = inlined_call_operand.vmem [shape: bf16[512,128], index: 3, kind: input, shape index: {}]
  %s4 = inlined_call_operand.vmem [shape: f32[1,128], index: 4, kind: input, shape index: {}]
  %s5 = inlined_call_operand.vmem [shape: f32[16,128], index: 5, kind: output, shape index: {}]
  %s6 = sld [smem:[#allocation0]]
  $region38: #{dqn_forward.7} parent=0
    _
  %s8 = ssub.s32 1, %s6
  %s9 = scalar_select 0, %s8, %s6
  // Predicated region
  $region2: #{dqn_forward.7} parent=0 // pred_check
    _
  $region3: #{dqn_forward.7} parent=0 // pred_check_branch
    %11 = sbr.rel (0) target = $region5
  $region4: #{dqn_forward.7} parent=0 // pred_region
    _
  $region5: #{dqn_forward.7} parent=0 // pred_fallthru
    _
  // Predicated region
  $region6: #{dqn_forward.7} parent=0 // pred_check
    _
  $region7: #{dqn_forward.7} parent=0 // pred_check_branch
    %13 = sbr.rel (0) target = $region9
  $region8: #{dqn_forward.7} parent=0 // pred_region
    _
  $region9: #{dqn_forward.7} parent=0 // pred_fallthru
    _
  // Predicated region
  $region10: #{dqn_forward.7} parent=0 // pred_check
    _
  $region11: #{dqn_forward.7} parent=0 // pred_check_branch
    %15 = sbr.rel (0) target = $region13
  $region12: #{dqn_forward.7} parent=0 // pred_region
    _
  $region13: #{dqn_forward.7} parent=0 // pred_fallthru
    _
  // Predicated region
  $region14: #{dqn_forward.7} parent=0 // pred_check
    _
  $region15: #{dqn_forward.7} parent=0 // pred_check_branch
    %17 = sbr.rel (0) target = $region17
  $region16: #{dqn_forward.7} parent=0 // pred_region
    _
  $region17: #{dqn_forward.7} parent=0 // pred_fallthru
    _
  // Predicated region
  $region18: #{dqn_forward.7} parent=0 // pred_check
    _
  $region19: #{dqn_forward.7} parent=0 // pred_check_branch
    %19 = sbr.rel (0) target = $region21
  $region20: #{dqn_forward.7} parent=0 // pred_region
    _
  $region21: #{dqn_forward.7} parent=0 // pred_fallthru
    _
  %p21 = scmp.eq.s32.totalorder 0, 0
  // Predicated region
  $region22: #{dqn_forward.7} parent=0 // pred_check
    %p22 = pneg %p21
  $region23: #{dqn_forward.7} parent=0 // pred_check_branch
    %24 = sbr.rel (%p22) target = $region25
  $region24: #{dqn_forward.7} parent=0 // pred_region
    %25 = vst [vmem:[#allocation2] sm:$0xff] 0.0
    %26 = vst [vmem:[#allocation2 + $0x8] sm:$0xff] 0.0
    %27 = vst [vmem:[#allocation2 + $0x10] sm:$0xff] 0.0
    %28 = vst [vmem:[#allocation2 + $0x18] sm:$0xff] 0.0
    %29 = vst [vmem:[#allocation2 + $0x20] sm:$0xff] 0.0
    %30 = vst [vmem:[#allocation2 + $0x28] sm:$0xff] 0.0
    %31 = vst [vmem:[#allocation2 + $0x30] sm:$0xff] 0.0
    %32 = vst [vmem:[#allocation2 + $0x38] sm:$0xff] 0.0
  $region25: #{dqn_forward.7} parent=0 // pred_fallthru
    _
  %v33 = vld [vmem:[#allocation2] sm:$0xff]
  %v34 = vld [vmem:[#allocation2 + $0x8] sm:$0xff]
  %v35 = vld [vmem:[#allocation2 + $0x10] sm:$0xff]
  %v36 = vld [vmem:[#allocation2 + $0x18] sm:$0xff]
  %v37 = vld [vmem:[#allocation2 + $0x20] sm:$0xff]
  %v38 = vld [vmem:[#allocation2 + $0x28] sm:$0xff]
  %v39 = vld [vmem:[#allocation2 + $0x30] sm:$0xff]
  %v40 = vld [vmem:[#allocation2 + $0x38] sm:$0xff]
  %v41 = vld [vmem:[%s0] sm:$0xf]
  %v42 = vld [vmem:[%s0 + $0x4] sm:$0xf]
  %v43 = vld [vmem:[%s1] sm:$0xff]
  %v44 = vld [vmem:[%s1 + $0x8] sm:$0xff]
  %v45 = vld [vmem:[%s1 + $0x10] sm:$0xff]
  %v46 = vld [vmem:[%s1 + $0x18] sm:$0xff]
  %v47 = vld [vmem:[%s1 + $0x20] sm:$0xff]
  %v48 = vld [vmem:[%s1 + $0x28] sm:$0xff]
  %v49 = vld [vmem:[%s1 + $0x30] sm:$0xff]
  %v50 = vld [vmem:[%s1 + $0x38] sm:$0xff]
  %v51 = vld [vmem:[%s1 + $0x40] sm:$0xff]
  %v52 = vld [vmem:[%s1 + $0x48] sm:$0xff]
  %v53 = vld [vmem:[%s1 + $0x50] sm:$0xff]
  %v54 = vld [vmem:[%s1 + $0x58] sm:$0xff]
  %v55 = vld [vmem:[%s1 + $0x60] sm:$0xff]
  %v56 = vld [vmem:[%s1 + $0x68] sm:$0xff]
  %v57 = vld [vmem:[%s1 + $0x70] sm:$0xff]
  %v58 = vld [vmem:[%s1 + $0x78] sm:$0xff]
  %v59 = vld [vmem:[%s1 + $0x80] sm:$0xff]
  %v60 = vld [vmem:[%s1 + $0x88] sm:$0xff]
  %v61 = vld [vmem:[%s1 + $0x90] sm:$0xff]
  %v62 = vld [vmem:[%s1 + $0x98] sm:$0xff]
  %v63 = vld [vmem:[%s1 + $0xa0] sm:$0xff]
  %v64 = vld [vmem:[%s1 + $0xa8] sm:$0xff]
  %v65 = vld [vmem:[%s1 + $0xb0] sm:$0xff]
  %v66 = vld [vmem:[%s1 + $0xb8] sm:$0xff]
  %v67 = vld [vmem:[%s1 + $0xc0] sm:$0xff]
  %v68 = vld [vmem:[%s1 + $0xc8] sm:$0xff]
  %v69 = vld [vmem:[%s1 + $0xd0] sm:$0xff]
  %v70 = vld [vmem:[%s1 + $0xd8] sm:$0xff]
  %v71 = vld [vmem:[%s1 + $0xe0] sm:$0xff]
  %v72 = vld [vmem:[%s1 + $0xe8] sm:$0xff]
  %v73 = vld [vmem:[%s1 + $0xf0] sm:$0xff]
  %v74 = vld [vmem:[%s1 + $0xf8] sm:$0xff]
  %v77 = vunpack.c.l.b16 %v41
  %v78 = vunpack.c.l.b16 %v42
  %v79 = vpack.c.b16 %v78, %v77
  %v113 = vunpack.c.l.b16 %v43
  %v114 = vunpack.c.h.b16 %v43
  %v115 = vunpack.c.l.b16 %v44
  %v116 = vunpack.c.h.b16 %v44
  %v117 = vunpack.c.l.b16 %v45
  %v118 = vunpack.c.h.b16 %v45
  %v119 = vunpack.c.l.b16 %v46
  %v120 = vunpack.c.h.b16 %v46
  %v121 = vunpack.c.l.b16 %v47
  %v122 = vunpack.c.h.b16 %v47
  %v123 = vunpack.c.l.b16 %v48
  %v124 = vunpack.c.h.b16 %v48
  %v125 = vunpack.c.l.b16 %v49
  %v126 = vunpack.c.h.b16 %v49
  %v127 = vunpack.c.l.b16 %v50
  %v128 = vunpack.c.h.b16 %v50
  %v129 = vunpack.c.l.b16 %v51
  %v130 = vunpack.c.h.b16 %v51
  %v131 = vunpack.c.l.b16 %v52
  %v132 = vunpack.c.h.b16 %v52
  %v133 = vunpack.c.l.b16 %v53
  %v134 = vunpack.c.h.b16 %v53
  %v135 = vunpack.c.l.b16 %v54
  %v136 = vunpack.c.h.b16 %v54
  %v137 = vunpack.c.l.b16 %v55
  %v138 = vunpack.c.h.b16 %v55
  %v139 = vunpack.c.l.b16 %v56
  %v140 = vunpack.c.h.b16 %v56
  %v141 = vunpack.c.l.b16 %v57
  %v142 = vunpack.c.h.b16 %v57
  %v143 = vunpack.c.l.b16 %v58
  %v144 = vunpack.c.h.b16 %v58
  %v145 = vunpack.c.l.b16 %v59
  %v146 = vunpack.c.h.b16 %v59
  %v147 = vunpack.c.l.b16 %v60
  %v148 = vunpack.c.h.b16 %v60
  %v149 = vunpack.c.l.b16 %v61
  %v150 = vunpack.c.h.b16 %v61
  %v151 = vunpack.c.l.b16 %v62
  %v152 = vunpack.c.h.b16 %v62
  %v153 = vunpack.c.l.b16 %v63
  %v154 = vunpack.c.h.b16 %v63
  %v155 = vunpack.c.l.b16 %v64
  %v156 = vunpack.c.h.b16 %v64
  %v157 = vunpack.c.l.b16 %v65
  %v158 = vunpack.c.h.b16 %v65
  %v159 = vunpack.c.l.b16 %v66
  %v160 = vunpack.c.h.b16 %v66
  %v161 = vunpack.c.l.b16 %v67
  %v162 = vunpack.c.h.b16 %v67
  %v163 = vunpack.c.l.b16 %v68
  %v164 = vunpack.c.h.b16 %v68
  %v165 = vunpack.c.l.b16 %v69
  %v166 = vunpack.c.h.b16 %v69
  %v167 = vunpack.c.l.b16 %v70
  %v168 = vunpack.c.h.b16 %v70
  %v169 = vunpack.c.l.b16 %v71
  %v170 = vunpack.c.h.b16 %v71
  %v171 = vunpack.c.l.b16 %v72
  %v172 = vunpack.c.h.b16 %v72
  %v173 = vunpack.c.l.b16 %v73
  %v174 = vunpack.c.h.b16 %v73
  %v175 = vunpack.c.l.b16 %v74
  %v176 = vunpack.c.h.b16 %v74
  %v177 = vpack.c.b16 %v117, %v113
  %v178 = vpack.c.b16 %v118, %v114
  %v179 = vpack.c.b16 %v119, %v115
  %v180 = vpack.c.b16 %v120, %v116
  %v181 = vpack.c.b16 %v125, %v121
  %v182 = vpack.c.b16 %v126, %v122
  %v183 = vpack.c.b16 %v127, %v123
  %v184 = vpack.c.b16 %v128, %v124
  %v185 = vpack.c.b16 %v133, %v129
  %v186 = vpack.c.b16 %v134, %v130
  %v187 = vpack.c.b16 %v135, %v131
  %v188 = vpack.c.b16 %v136, %v132
  %v189 = vpack.c.b16 %v141, %v137
  %v190 = vpack.c.b16 %v142, %v138
  %v191 = vpack.c.b16 %v143, %v139
  %v192 = vpack.c.b16 %v144, %v140
  %v193 = vpack.c.b16 %v149, %v145
  %v194 = vpack.c.b16 %v150, %v146
  %v195 = vpack.c.b16 %v151, %v147
  %v196 = vpack.c.b16 %v152, %v148
  %v197 = vpack.c.b16 %v157, %v153
  %v198 = vpack.c.b16 %v158, %v154
  %v199 = vpack.c.b16 %v159, %v155
  %v200 = vpack.c.b16 %v160, %v156
  %v201 = vpack.c.b16 %v165, %v161
  %v202 = vpack.c.b16 %v166, %v162
  %v203 = vpack.c.b16 %v167, %v163
  %v204 = vpack.c.b16 %v168, %v164
  %v205 = vpack.c.b16 %v173, %v169
  %v206 = vpack.c.b16 %v174, %v170
  %v207 = vpack.c.b16 %v175, %v171
  %v208 = vpack.c.b16 %v176, %v172
  %241 = vmatprep.subr.bf16.mxu0 %v206
  %242 = vmatpush1.bf16.msra.mxu0 %v205
  %243 = vmatprep.subr.bf16.mxu0 %v202
  %244 = vmatpush1.bf16.msra.mxu0 %v201
  %245 = vmatprep.subr.bf16.mxu0 %v198
  %246 = vmatpush1.bf16.msra.mxu0 %v197
  %247 = vmatprep.subr.bf16.mxu0 %v194
  %248 = vmatpush1.bf16.msra.mxu0 %v193
  %249 = vmatprep.subr.bf16.mxu0 %v190
  %250 = vmatpush1.bf16.msra.mxu0 %v189
  %251 = vmatprep.subr.bf16.mxu0 %v186
  %252 = vmatpush1.bf16.msra.mxu0 %v185
  %253 = vmatprep.subr.bf16.mxu0 %v182
  %254 = vmatpush1.bf16.msra.mxu0 %v181
  %255 = vmatprep.subr.bf16.mxu0 %v178
  %256 = vmatpush1.bf16.msra.mxu0 %v177
  %257 = vmatprep.subr.bf16.mxu0 0
  %258 = vmatpush2.bf16.msra.mxu0 0
  %259 = vmatprep.subr.bf16.mxu0 0
  %260 = vmatpush2.bf16.msra.mxu0 0
  %261 = vmatprep.subr.bf16.mxu0 0
  %262 = vmatpush2.bf16.msra.mxu0 0
  %263 = vmatprep.subr.bf16.mxu0 0
  %264 = vmatpush2.bf16.msra.mxu0 0
  %265 = vmatprep.subr.bf16.mxu0 0
  %266 = vmatpush2.bf16.msra.mxu0 0
  %267 = vmatprep.subr.bf16.mxu0 0
  %268 = vmatpush2.bf16.msra.mxu0 0
  %269 = vmatprep.subr.bf16.mxu0 0
  %270 = vmatpush2.bf16.msra.mxu0 0
  %271 = vmatprep.subr.bf16.mxu0 0
  %272 = vmatpush2.bf16.msra.mxu0 0
  %273 = vmatprep.mubr.bf16.mxu0 0
  %274 = vmatmul.mubr.bf16.gmra.mxu0 %v79
  %v275 = vpop.f32.mrf.mxu0
  %v276 = vadd.f32 0.0, %v275
  %v277 = vpop.f32.mrf.mxu0
  %v278 = vadd.f32 0.0, %v277
  %v279 = vpop.f32.mrf.mxu0
  %v280 = vadd.f32 0.0, %v279
  %v281 = vpop.f32.mrf.mxu0
  %v282 = vadd.f32 0.0, %v281
  %283 = vdwg.mxu0
  %284 = vmatprep.subr.bf16.mxu0 %v208
  %285 = vmatpush1.bf16.msra.mxu0 %v207
  %286 = vmatprep.subr.bf16.mxu0 %v204
  %287 = vmatpush1.bf16.msra.mxu0 %v203
  %288 = vmatprep.subr.bf16.mxu0 %v200
  %289 = vmatpush1.bf16.msra.mxu0 %v199
  %290 = vmatprep.subr.bf16.mxu0 %v196
  %291 = vmatpush1.bf16.msra.mxu0 %v195
  %292 = vmatprep.subr.bf16.mxu0 %v192
  %293 = vmatpush1.bf16.msra.mxu0 %v191
  %294 = vmatprep.subr.bf16.mxu0 %v188
  %295 = vmatpush1.bf16.msra.mxu0 %v187
  %296 = vmatprep.subr.bf16.mxu0 %v184
  %297 = vmatpush1.bf16.msra.mxu0 %v183
  %298 = vmatprep.subr.bf16.mxu0 %v180
  %299 = vmatpush1.bf16.msra.mxu0 %v179
  %300 = vmatprep.subr.bf16.mxu0 0
  %301 = vmatpush2.bf16.msra.mxu0 0
  %302 = vmatprep.subr.bf16.mxu0 0
  %303 = vmatpush2.bf16.msra.mxu0 0
  %304 = vmatprep.subr.bf16.mxu0 0
  %305 = vmatpush2.bf16.msra.mxu0 0
  %306 = vmatprep.subr.bf16.mxu0 0
  %307 = vmatpush2.bf16.msra.mxu0 0
  %308 = vmatprep.subr.bf16.mxu0 0
  %309 = vmatpush2.bf16.msra.mxu0 0
  %310 = vmatprep.subr.bf16.mxu0 0
  %311 = vmatpush2.bf16.msra.mxu0 0
  %312 = vmatprep.subr.bf16.mxu0 0
  %313 = vmatpush2.bf16.msra.mxu0 0
  %314 = vmatprep.subr.bf16.mxu0 0
  %315 = vmatpush2.bf16.msra.mxu0 0
  %316 = vmatprep.mubr.bf16.mxu0 0
  %317 = vmatmul.mubr.bf16.gmra.mxu0 %v79
  %v318 = vpop.f32.mrf.mxu0
  %v319 = vadd.f32 0.0, %v318
  %v320 = vpop.f32.mrf.mxu0
  %v321 = vadd.f32 0.0, %v320
  %v322 = vpop.f32.mrf.mxu0
  %v323 = vadd.f32 0.0, %v322
  %v324 = vpop.f32.mrf.mxu0
  %v325 = vadd.f32 0.0, %v324
  %326 = vdwg.mxu0
  %v327 = vadd.f32 %v33, %v276
  %v328 = vadd.f32 %v34, %v278
  %v329 = vadd.f32 %v35, %v319
  %v330 = vadd.f32 %v36, %v321
  %v331 = vadd.f32 %v37, %v280
  %v332 = vadd.f32 %v38, %v282
  %v333 = vadd.f32 %v39, %v323
  %v334 = vadd.f32 %v40, %v325
  %335 = vst [vmem:[#allocation2] sm:$0xff] %v327
  %336 = vst [vmem:[#allocation2 + $0x8] sm:$0xff] %v328
  %337 = vst [vmem:[#allocation2 + $0x10] sm:$0xff] %v329
  %338 = vst [vmem:[#allocation2 + $0x18] sm:$0xff] %v330
  %339 = vst [vmem:[#allocation2 + $0x20] sm:$0xff] %v331
  %340 = vst [vmem:[#allocation2 + $0x28] sm:$0xff] %v332
  %341 = vst [vmem:[#allocation2 + $0x30] sm:$0xff] %v333
  %342 = vst [vmem:[#allocation2 + $0x38] sm:$0xff] %v334
  // Predicated region
  $region26: #{dqn_forward.7} parent=0 // pred_check
    %p343 = pneg %p21
  $region27: #{dqn_forward.7} parent=0 // pred_check_branch
    %345 = sbr.rel (%p343) target = $region29
  $region28: #{dqn_forward.7} parent=0 // pred_region
    %v346 = vld [vmem:[#allocation2] sm:$0xff]
    %v347 = vld [vmem:[#allocation2 + $0x8] sm:$0xff]
    %v348 = vld [vmem:[#allocation2 + $0x10] sm:$0xff]
    %v349 = vld [vmem:[#allocation2 + $0x18] sm:$0xff]
    %v350 = vld [vmem:[#allocation2 + $0x20] sm:$0xff]
    %v351 = vld [vmem:[#allocation2 + $0x28] sm:$0xff]
    %v352 = vld [vmem:[#allocation2 + $0x30] sm:$0xff]
    %v353 = vld [vmem:[#allocation2 + $0x38] sm:$0xff]
    %v354 = vld [vmem:[%s2] sm:$0xf]
    %v356 = vlaneseq
    %v357 = vshrl.u32 %v356, 7
    %v358 = vsub.s32 0, %v357
    %v359 = vrot.slane %v354, %v358
    %v360 = vlaneseq
    %v361 = vshrl.u32 %v360, 7
    %v362 = vsub.s32 1, %v361
    %v363 = vrot.slane %v354, %v362
    %v364 = vlaneseq
    %v365 = vshrl.u32 %v364, 7
    %v366 = vsub.s32 2, %v365
    %v367 = vrot.slane %v354, %v366
    %v368 = vlaneseq
    %v369 = vshrl.u32 %v368, 7
    %v370 = vsub.s32 3, %v369
    %v371 = vrot.slane %v354, %v370
    %v376 = vadd.f32 %v346, %v359
    %v377 = vadd.f32 %v347, %v363
    %v378 = vadd.f32 %v348, %v367
    %v379 = vadd.f32 %v349, %v371
    %v380 = vadd.f32 %v350, %v359
    %v381 = vadd.f32 %v351, %v363
    %v382 = vadd.f32 %v352, %v367
    %v383 = vadd.f32 %v353, %v371
    %v384 = vmax.f32 %v376, 0.0
    %v385 = vmax.f32 %v377, 0.0
    %v386 = vmax.f32 %v378, 0.0
    %v387 = vmax.f32 %v379, 0.0
    %v388 = vmax.f32 %v380, 0.0
    %v389 = vmax.f32 %v381, 0.0
    %v390 = vmax.f32 %v382, 0.0
    %v391 = vmax.f32 %v383, 0.0
    %v392 = vpack.c.bf16 %v388, %v384
    %v393 = vpack.c.bf16 %v389, %v385
    %v394 = vpack.c.bf16 %v390, %v386
    %v395 = vpack.c.bf16 %v391, %v387
    %v396 = vld [vmem:[%s3] sm:$0xf]
    %v397 = vld [vmem:[%s3 + $0x4] sm:$0xf]
    %v398 = vld [vmem:[%s3 + $0x8] sm:$0xf]
    %v399 = vld [vmem:[%s3 + $0xc] sm:$0xf]
    %v400 = vld [vmem:[%s3 + $0x10] sm:$0xf]
    %v401 = vld [vmem:[%s3 + $0x14] sm:$0xf]
    %v402 = vld [vmem:[%s3 + $0x18] sm:$0xf]
    %v403 = vld [vmem:[%s3 + $0x1c] sm:$0xf]
    %v404 = vld [vmem:[%s3 + $0x20] sm:$0xf]
    %v405 = vld [vmem:[%s3 + $0x24] sm:$0xf]
    %v406 = vld [vmem:[%s3 + $0x28] sm:$0xf]
    %v407 = vld [vmem:[%s3 + $0x2c] sm:$0xf]
    %v408 = vld [vmem:[%s3 + $0x30] sm:$0xf]
    %v409 = vld [vmem:[%s3 + $0x34] sm:$0xf]
    %v410 = vld [vmem:[%s3 + $0x38] sm:$0xf]
    %v411 = vld [vmem:[%s3 + $0x3c] sm:$0xf]
    %v412 = vld [vmem:[%s3 + $0x40] sm:$0xf]
    %v413 = vld [vmem:[%s3 + $0x44] sm:$0xf]
    %v414 = vld [vmem:[%s3 + $0x48] sm:$0xf]
    %v415 = vld [vmem:[%s3 + $0x4c] sm:$0xf]
    %v416 = vld [vmem:[%s3 + $0x50] sm:$0xf]
    %v417 = vld [vmem:[%s3 + $0x54] sm:$0xf]
    %v418 = vld [vmem:[%s3 + $0x58] sm:$0xf]
    %v419 = vld [vmem:[%s3 + $0x5c] sm:$0xf]
    %v420 = vld [vmem:[%s3 + $0x60] sm:$0xf]
    %v421 = vld [vmem:[%s3 + $0x64] sm:$0xf]
    %v422 = vld [vmem:[%s3 + $0x68] sm:$0xf]
    %v423 = vld [vmem:[%s3 + $0x6c] sm:$0xf]
    %v424 = vld [vmem:[%s3 + $0x70] sm:$0xf]
    %v425 = vld [vmem:[%s3 + $0x74] sm:$0xf]
    %v426 = vld [vmem:[%s3 + $0x78] sm:$0xf]
    %v427 = vld [vmem:[%s3 + $0x7c] sm:$0xf]
    %v428 = vld [vmem:[%s3 + $0x80] sm:$0xf]
    %v429 = vld [vmem:[%s3 + $0x84] sm:$0xf]
    %v430 = vld [vmem:[%s3 + $0x88] sm:$0xf]
    %v431 = vld [vmem:[%s3 + $0x8c] sm:$0xf]
    %v432 = vld [vmem:[%s3 + $0x90] sm:$0xf]
    %v433 = vld [vmem:[%s3 + $0x94] sm:$0xf]
    %v434 = vld [vmem:[%s3 + $0x98] sm:$0xf]
    %v435 = vld [vmem:[%s3 + $0x9c] sm:$0xf]
    %v436 = vld [vmem:[%s3 + $0xa0] sm:$0xf]
    %v437 = vld [vmem:[%s3 + $0xa4] sm:$0xf]
    %v438 = vld [vmem:[%s3 + $0xa8] sm:$0xf]
    %v439 = vld [vmem:[%s3 + $0xac] sm:$0xf]
    %v440 = vld [vmem:[%s3 + $0xb0] sm:$0xf]
    %v441 = vld [vmem:[%s3 + $0xb4] sm:$0xf]
    %v442 = vld [vmem:[%s3 + $0xb8] sm:$0xf]
    %v443 = vld [vmem:[%s3 + $0xbc] sm:$0xf]
    %v444 = vld [vmem:[%s3 + $0xc0] sm:$0xf]
    %v445 = vld [vmem:[%s3 + $0xc4] sm:$0xf]
    %v446 = vld [vmem:[%s3 + $0xc8] sm:$0xf]
    %v447 = vld [vmem:[%s3 + $0xcc] sm:$0xf]
    %v448 = vld [vmem:[%s3 + $0xd0] sm:$0xf]
    %v449 = vld [vmem:[%s3 + $0xd4] sm:$0xf]
    %v450 = vld [vmem:[%s3 + $0xd8] sm:$0xf]
    %v451 = vld [vmem:[%s3 + $0xdc] sm:$0xf]
    %v452 = vld [vmem:[%s3 + $0xe0] sm:$0xf]
    %v453 = vld [vmem:[%s3 + $0xe4] sm:$0xf]
    %v454 = vld [vmem:[%s3 + $0xe8] sm:$0xf]
    %v455 = vld [vmem:[%s3 + $0xec] sm:$0xf]
    %v456 = vld [vmem:[%s3 + $0xf0] sm:$0xf]
    %v457 = vld [vmem:[%s3 + $0xf4] sm:$0xf]
    %v458 = vld [vmem:[%s3 + $0xf8] sm:$0xf]
    %v459 = vld [vmem:[%s3 + $0xfc] sm:$0xf]
    %v460 = vld [vmem:[%s4] sm:$0x1]
    %v462 = vlaneseq
    %v463 = vshrl.u32 %v462, 7
    %v464 = vsub.s32 0, %v463
    %v465 = vrot.slane %v460, %v464
    %v531 = vunpack.c.l.b16 %v396
    %v532 = vunpack.c.l.b16 %v397
    %v533 = vunpack.c.l.b16 %v398
    %v534 = vunpack.c.l.b16 %v399
    %v535 = vunpack.c.l.b16 %v400
    %v536 = vunpack.c.l.b16 %v401
    %v537 = vunpack.c.l.b16 %v402
    %v538 = vunpack.c.l.b16 %v403
    %v539 = vunpack.c.l.b16 %v404
    %v540 = vunpack.c.l.b16 %v405
    %v541 = vunpack.c.l.b16 %v406
    %v542 = vunpack.c.l.b16 %v407
    %v543 = vunpack.c.l.b16 %v408
    %v544 = vunpack.c.l.b16 %v409
    %v545 = vunpack.c.l.b16 %v410
    %v546 = vunpack.c.l.b16 %v411
    %v547 = vunpack.c.l.b16 %v412
    %v548 = vunpack.c.l.b16 %v413
    %v549 = vunpack.c.l.b16 %v414
    %v550 = vunpack.c.l.b16 %v415
    %v551 = vunpack.c.l.b16 %v416
    %v552 = vunpack.c.l.b16 %v417
    %v553 = vunpack.c.l.b16 %v418
    %v554 = vunpack.c.l.b16 %v419
    %v555 = vunpack.c.l.b16 %v420
    %v556 = vunpack.c.l.b16 %v421
    %v557 = vunpack.c.l.b16 %v422
    %v558 = vunpack.c.l.b16 %v423
    %v559 = vunpack.c.l.b16 %v424
    %v560 = vunpack.c.l.b16 %v425
    %v561 = vunpack.c.l.b16 %v426
    %v562 = vunpack.c.l.b16 %v427
    %v563 = vunpack.c.l.b16 %v428
    %v564 = vunpack.c.l.b16 %v429
    %v565 = vunpack.c.l.b16 %v430
    %v566 = vunpack.c.l.b16 %v431
    %v567 = vunpack.c.l.b16 %v432
    %v568 = vunpack.c.l.b16 %v433
    %v569 = vunpack.c.l.b16 %v434
    %v570 = vunpack.c.l.b16 %v435
    %v571 = vunpack.c.l.b16 %v436
    %v572 = vunpack.c.l.b16 %v437
    %v573 = vunpack.c.l.b16 %v438
    %v574 = vunpack.c.l.b16 %v439
    %v575 = vunpack.c.l.b16 %v440
    %v576 = vunpack.c.l.b16 %v441
    %v577 = vunpack.c.l.b16 %v442
    %v578 = vunpack.c.l.b16 %v443
    %v579 = vunpack.c.l.b16 %v444
    %v580 = vunpack.c.l.b16 %v445
    %v581 = vunpack.c.l.b16 %v446
    %v582 = vunpack.c.l.b16 %v447
    %v583 = vunpack.c.l.b16 %v448
    %v584 = vunpack.c.l.b16 %v449
    %v585 = vunpack.c.l.b16 %v450
    %v586 = vunpack.c.l.b16 %v451
    %v587 = vunpack.c.l.b16 %v452
    %v588 = vunpack.c.l.b16 %v453
    %v589 = vunpack.c.l.b16 %v454
    %v590 = vunpack.c.l.b16 %v455
    %v591 = vunpack.c.l.b16 %v456
    %v592 = vunpack.c.l.b16 %v457
    %v593 = vunpack.c.l.b16 %v458
    %v594 = vunpack.c.l.b16 %v459
    %v595 = vpack.c.b16 %v532, %v531
    %v596 = vpack.c.b16 %v534, %v533
    %v597 = vpack.c.b16 %v536, %v535
    %v598 = vpack.c.b16 %v538, %v537
    %v599 = vpack.c.b16 %v540, %v539
    %v600 = vpack.c.b16 %v542, %v541
    %v601 = vpack.c.b16 %v544, %v543
    %v602 = vpack.c.b16 %v546, %v545
    %v603 = vpack.c.b16 %v548, %v547
    %v604 = vpack.c.b16 %v550, %v549
    %v605 = vpack.c.b16 %v552, %v551
    %v606 = vpack.c.b16 %v554, %v553
    %v607 = vpack.c.b16 %v556, %v555
    %v608 = vpack.c.b16 %v558, %v557
    %v609 = vpack.c.b16 %v560, %v559
    %v610 = vpack.c.b16 %v562, %v561
    %v611 = vpack.c.b16 %v564, %v563
    %v612 = vpack.c.b16 %v566, %v565
    %v613 = vpack.c.b16 %v568, %v567
    %v614 = vpack.c.b16 %v570, %v569
    %v615 = vpack.c.b16 %v572, %v571
    %v616 = vpack.c.b16 %v574, %v573
    %v617 = vpack.c.b16 %v576, %v575
    %v618 = vpack.c.b16 %v578, %v577
    %v619 = vpack.c.b16 %v580, %v579
    %v620 = vpack.c.b16 %v582, %v581
    %v621 = vpack.c.b16 %v584, %v583
    %v622 = vpack.c.b16 %v586, %v585
    %v623 = vpack.c.b16 %v588, %v587
    %v624 = vpack.c.b16 %v590, %v589
    %v625 = vpack.c.b16 %v592, %v591
    %v626 = vpack.c.b16 %v594, %v593
    %659 = vmatprep.subr.bf16.mxu0 0
    %660 = vmatpush1.bf16.msra.mxu0 %v602
    %661 = vmatprep.subr.bf16.mxu0 0
    %662 = vmatpush1.bf16.msra.mxu0 %v601
    %663 = vmatprep.subr.bf16.mxu0 0
    %664 = vmatpush1.bf16.msra.mxu0 %v600
    %665 = vmatprep.subr.bf16.mxu0 0
    %666 = vmatpush1.bf16.msra.mxu0 %v599
    %667 = vmatprep.subr.bf16.mxu0 0
    %668 = vmatpush1.bf16.msra.mxu0 %v598
    %669 = vmatprep.subr.bf16.mxu0 0
    %670 = vmatpush1.bf16.msra.mxu0 %v597
    %671 = vmatprep.subr.bf16.mxu0 0
    %672 = vmatpush1.bf16.msra.mxu0 %v596
    %673 = vmatprep.subr.bf16.mxu0 0
    %674 = vmatpush1.bf16.msra.mxu0 %v595
    %675 = vmatprep.subr.bf16.mxu0 0
    %676 = vmatpush2.bf16.msra.mxu0 %v610
    %677 = vmatprep.subr.bf16.mxu0 0
    %678 = vmatpush2.bf16.msra.mxu0 %v609
    %679 = vmatprep.subr.bf16.mxu0 0
    %680 = vmatpush2.bf16.msra.mxu0 %v608
    %681 = vmatprep.subr.bf16.mxu0 0
    %682 = vmatpush2.bf16.msra.mxu0 %v607
    %683 = vmatprep.subr.bf16.mxu0 0
    %684 = vmatpush2.bf16.msra.mxu0 %v606
    %685 = vmatprep.subr.bf16.mxu0 0
    %686 = vmatpush2.bf16.msra.mxu0 %v605
    %687 = vmatprep.subr.bf16.mxu0 0
    %688 = vmatpush2.bf16.msra.mxu0 %v604
    %689 = vmatprep.subr.bf16.mxu0 0
    %690 = vmatpush2.bf16.msra.mxu0 %v603
    %691 = vmatprep.mubr.bf16.mxu0 %v393
    %692 = vmatmul.mubr.bf16.gmra.mxu0 %v392
    %v693 = vpop.f32.mrf.mxu0
    %v694 = vadd.f32 %v465, %v693
    %v695 = vpop.f32.mrf.mxu0
    %v696 = vpop.f32.mrf.mxu0
    %v697 = vadd.f32 %v465, %v696
    %v698 = vpop.f32.mrf.mxu0
    %699 = vdwg.mxu0
    %700 = vmatprep.subr.bf16.mxu0 0
    %701 = vmatpush1.bf16.msra.mxu0 %v618
    %702 = vmatprep.subr.bf16.mxu0 0
    %703 = vmatpush1.bf16.msra.mxu0 %v617
    %704 = vmatprep.subr.bf16.mxu0 0
    %705 = vmatpush1.bf16.msra.mxu0 %v616
    %706 = vmatprep.subr.bf16.mxu0 0
    %707 = vmatpush1.bf16.msra.mxu0 %v615
    %708 = vmatprep.subr.bf16.mxu0 0
    %709 = vmatpush1.bf16.msra.mxu0 %v614
    %710 = vmatprep.subr.bf16.mxu0 0
    %711 = vmatpush1.bf16.msra.mxu0 %v613
    %712 = vmatprep.subr.bf16.mxu0 0
    %713 = vmatpush1.bf16.msra.mxu0 %v612
    %714 = vmatprep.subr.bf16.mxu0 0
    %715 = vmatpush1.bf16.msra.mxu0 %v611
    %716 = vmatprep.subr.bf16.mxu0 0
    %717 = vmatpush2.bf16.msra.mxu0 %v626
    %718 = vmatprep.subr.bf16.mxu0 0
    %719 = vmatpush2.bf16.msra.mxu0 %v625
    %720 = vmatprep.subr.bf16.mxu0 0
    %721 = vmatpush2.bf16.msra.mxu0 %v624
    %722 = vmatprep.subr.bf16.mxu0 0
    %723 = vmatpush2.bf16.msra.mxu0 %v623
    %724 = vmatprep.subr.bf16.mxu0 0
    %725 = vmatpush2.bf16.msra.mxu0 %v622
    %726 = vmatprep.subr.bf16.mxu0 0
    %727 = vmatpush2.bf16.msra.mxu0 %v621
    %728 = vmatprep.subr.bf16.mxu0 0
    %729 = vmatpush2.bf16.msra.mxu0 %v620
    %730 = vmatprep.subr.bf16.mxu0 0
    %731 = vmatpush2.bf16.msra.mxu0 %v619
    %732 = vmatprep.mubr.bf16.mxu0 %v395
    %733 = vmatmul.mubr.bf16.gmra.mxu0 %v394
    %v734 = vpop.f32.mrf.mxu0
    %v735 = vadd.f32 %v694, %v734
    %v736 = vpop.f32.mrf.mxu0
    %v737 = vpop.f32.mrf.mxu0
    %v738 = vadd.f32 %v697, %v737
    %v739 = vpop.f32.mrf.mxu0
    %740 = vdwg.mxu0
    %741 = vst [vmem:[%s5] sm:$0xff] %v735
    %742 = vst [vmem:[%s5 + $0x8] sm:$0xff] %v738
  $region29: #{dqn_forward.7} parent=0 // pred_fallthru
    _
  // Predicated region
  $region30: #{dqn_forward.7} parent=0 // pred_check
    _
  $region31: #{dqn_forward.7} parent=0 // pred_check_branch
    %744 = sbr.rel (0) target = $region33
  $region32: #{dqn_forward.7} parent=0 // pred_region
    _
  $region33: #{dqn_forward.7} parent=0 // pred_fallthru
    _
  // Predicated region
  $region34: #{dqn_forward.7} parent=0 // pred_check
    _
  $region35: #{dqn_forward.7} parent=0 // pred_check_branch
    %746 = sbr.rel (0) target = $region37
  $region36: #{dqn_forward.7} parent=0 // pred_region
    _
  $region37: #{dqn_forward.7} parent=0 // pred_fallthru
    _

</llo_original>
